<compile_context>
chip_gen: v7x
topology: tpu7x:2x2x1
jax: 0.10.0
libtpu: 0.0.40
codegen_flags: <defaults>
</compile_context>

<pallas_src>
import functools

import jax
import jax.numpy as jnp
from jax.experimental import pallas as pl
from jax.experimental.pallas import tpu as pltpu


# ------------------------------ helpers -------------------------------------

def _halo_pad(W):
    """Flat halo width (>= W+1) rounded to a full lane group so the large
    interior store into the padded scratch is lane-aligned."""
    return -(-(W + 1) // 128) * 128


def _fill_patches(ap_ref, patches_ref, mask_ref, a, W):
    """Build the bf16 (9*C, H*W) im2col matrix for a 3x3 'same' conv.

    `a` is the (C, H*W) activation (flattened spatial dim in lanes).  It is
    written once into the flat zero-haloed bf16 scratch `ap_ref`
    (C, pad + H*W + pad); tap (kh, kw) is then the static lane slice at offset
    (kh-1)*W + (kw-1).  The flat halo supplies zeros for out-of-image rows;
    the image's left/right column borders (which would otherwise wrap into the
    neighbouring row) are zeroed with the precomputed per-lane masks in
    `mask_ref` (row 0: w>0 valid, row 1: w<W-1 valid).
    """
    C, HW = a.shape
    pad = _halo_pad(W)
    halo = jnp.zeros((C, W + 1), ap_ref.dtype)
    ap_ref[:, pad - (W + 1):pad] = halo                    # top halo (only W+1)
    ap_ref[:, pad + HW:pad + HW + W + 1] = halo            # bottom halo
    ap_ref[:, pad:pad + HW] = a.astype(ap_ref.dtype)       # interior, aligned
    ap = ap_ref[...]
    m_left = mask_ref[0:1, :]     # 0.0 where w == 0     (source col w-1 invalid)
    m_right = mask_ref[1:2, :]    # 0.0 where w == W-1   (source col w+1 invalid)
    for kh in range(3):
        for kw in range(3):
            t = kh * 3 + kw
            off = (kh - 1) * W + (kw - 1)
            s = ap[:, pad + off:pad + off + HW]            # static lane shift
            if kw == 0:
                s = s * m_left
            elif kw == 2:
                s = s * m_right
            patches_ref[t * C:(t + 1) * C, :] = s


# ----------------------------- Pallas kernels -------------------------------

def _conv1_kernel(x_ref, mask_ref, scale_ref, shift_ref, w_ref, b_ref,
                  y_ref, psum_ref, psq_ref, ap_ref, patches_ref, *, W):
    """BN1(scale/shift) + LeakyReLU(0.2) -> 3x3 conv (pad 1, stride 1) + bias,
    plus fused per-image partial sums of the f32 result (feeds BN2 stats)."""
    x = x_ref[0].astype(jnp.float32)                       # (Cin, HW)
    a = x * scale_ref[...] + shift_ref[...]                # BN1 (batch stats)
    a = jnp.where(a >= 0.0, a, 0.2 * a)                    # LeakyReLU(0.2)
    _fill_patches(ap_ref, patches_ref, mask_ref, a, W)
    y = jnp.dot(w_ref[...], patches_ref[...],              # (Cout,9Cin)@(9Cin,HW)
                preferred_element_type=jnp.float32)
    y = y + b_ref[...]                                     # (Cout, HW)
    y_ref[0] = y.astype(y_ref.dtype)                       # bf16 intermediate
    psum_ref[0] = jnp.sum(y, axis=1, keepdims=True)        # BN2 partial stats
    psq_ref[0] = jnp.sum(y * y, axis=1, keepdims=True)


def _conv2_kernel(y_ref, x_ref, mask_ref, scale_ref, shift_ref, w_ref, ws_ref,
                  b_ref, o_ref, ap_ref, patches_ref, *, W):
    """BN2 + LeakyReLU -> 3x3 conv (pad 1, stride 1), with the 1x1 skip conv of
    the raw input and the combined (conv2 + skip) bias fused in."""
    y = y_ref[0].astype(jnp.float32)                       # (Cmid, HW)
    a = y * scale_ref[...] + shift_ref[...]                # BN2 (batch stats)
    a = jnp.where(a >= 0.0, a, 0.2 * a)                    # LeakyReLU(0.2)
    _fill_patches(ap_ref, patches_ref, mask_ref, a, W)
    acc = jnp.dot(w_ref[...], patches_ref[...],            # (Cout,9Cmid)@(.,HW)
                  preferred_element_type=jnp.float32)
    skip = jnp.dot(ws_ref[...], x_ref[0].astype(jnp.bfloat16),
                   preferred_element_type=jnp.float32)     # 1x1 skip conv
    o_ref[0] = (acc + skip + b_ref[...]).astype(o_ref.dtype)


# ----------------------------- Pallas wrappers ------------------------------

def _conv1(x, colmask, scale, shift, w9, b, *, W):
    N, Cin, HW = x.shape
    Cout, K = w9.shape
    pad = _halo_pad(W)
    flops = 2 * N * HW * Cout * K
    bytes_accessed = (4 * x.size + 2 * colmask.size + 2 * w9.size
                      + 4 * (scale.size + shift.size + b.size)
                      + 2 * N * Cout * HW + 2 * 4 * N * Cout)
    return pl.pallas_call(
        functools.partial(_conv1_kernel, W=W),
        out_shape=(jax.ShapeDtypeStruct((N, Cout, HW), jnp.bfloat16),
                   jax.ShapeDtypeStruct((N, Cout, 1), jnp.float32),
                   jax.ShapeDtypeStruct((N, Cout, 1), jnp.float32)),
        grid=(N,),
        in_specs=[
            pl.BlockSpec((1, Cin, HW), lambda n: (n, 0, 0)),
            pl.BlockSpec((2, HW), lambda n: (0, 0)),
            pl.BlockSpec((Cin, 1), lambda n: (0, 0)),
            pl.BlockSpec((Cin, 1), lambda n: (0, 0)),
            pl.BlockSpec((Cout, K), lambda n: (0, 0)),
            pl.BlockSpec((Cout, 1), lambda n: (0, 0)),
        ],
        out_specs=(
            pl.BlockSpec((1, Cout, HW), lambda n: (n, 0, 0)),
            pl.BlockSpec((1, Cout, 1), lambda n: (n, 0, 0)),
            pl.BlockSpec((1, Cout, 1), lambda n: (n, 0, 0)),
        ),
        scratch_shapes=[pltpu.VMEM((Cin, HW + 2 * pad), jnp.bfloat16),
                        pltpu.VMEM((K, HW), jnp.bfloat16)],
        compiler_params=pltpu.CompilerParams(dimension_semantics=("parallel",)),
        cost_estimate=pl.CostEstimate(flops=flops, transcendentals=0,
                                      bytes_accessed=bytes_accessed),
    )(x, colmask, scale, shift, w9, b)


def _conv2_skip(y1, x, colmask, scale, shift, w9, ws, bias, *, W):
    N, Cmid, HW = y1.shape
    Cin = x.shape[1]
    Cout, K = w9.shape
    pad = _halo_pad(W)
    flops = 2 * N * HW * Cout * K + 2 * N * HW * Cout * Cin
    bytes_accessed = (2 * y1.size + 4 * x.size + 2 * colmask.size
                      + 2 * (w9.size + ws.size)
                      + 4 * (scale.size + shift.size + bias.size)
                      + 4 * N * Cout * HW)
    return pl.pallas_call(
        functools.partial(_conv2_kernel, W=W),
        out_shape=jax.ShapeDtypeStruct((N, Cout, HW), jnp.float32),
        grid=(N,),
        in_specs=[
            pl.BlockSpec((1, Cmid, HW), lambda n: (n, 0, 0)),
            pl.BlockSpec((1, Cin, HW), lambda n: (n, 0, 0)),
            pl.BlockSpec((2, HW), lambda n: (0, 0)),
            pl.BlockSpec((Cmid, 1), lambda n: (0, 0)),
            pl.BlockSpec((Cmid, 1), lambda n: (0, 0)),
            pl.BlockSpec((Cout, K), lambda n: (0, 0)),
            pl.BlockSpec((Cout, Cin), lambda n: (0, 0)),
            pl.BlockSpec((Cout, 1), lambda n: (0, 0)),
        ],
        out_specs=pl.BlockSpec((1, Cout, HW), lambda n: (n, 0, 0)),
        scratch_shapes=[pltpu.VMEM((Cmid, HW + 2 * pad), jnp.bfloat16),
                        pltpu.VMEM((K, HW), jnp.bfloat16)],
        compiler_params=pltpu.CompilerParams(dimension_semantics=("parallel",)),
        cost_estimate=pl.CostEstimate(flops=flops, transcendentals=0,
                                      bytes_accessed=bytes_accessed),
    )(y1, x, colmask, scale, shift, w9, ws, bias)


# ------------------------------ forward pass --------------------------------

@functools.partial(jax.jit, static_argnames=("stride",))
def residual_unit2_forward(x_nchw, params, stride=1, eps=1e-5):
    if stride != 1:
        raise NotImplementedError("residual_unit2 Pallas kernel: stride > 1 is a TODO")
    N, Cin, H, W = x_nchw.shape
    Cout = params["w1"].shape[0]
    HW = H * W
    x = x_nchw.reshape(N, Cin, HW)           # free reshape, stays NCHW-ordered

    # per-lane column-border masks for the 3x3 taps (shared by both convs)
    wcol = jnp.arange(HW, dtype=jnp.int32) % W
    colmask = jnp.stack([wcol != 0, wcol != W - 1]).astype(jnp.bfloat16)

    # BN1 batch statistics: one fused XLA pass (sum & sum-of-squares).
    # NOTE: E[x^2]-E[x]^2 form in f32 — precision is ample at these counts.
    cnt1 = N * HW
    mean1 = jnp.sum(x, axis=(0, 2)) / cnt1
    var1 = jnp.maximum(jnp.sum(x * x, axis=(0, 2)) / cnt1 - mean1 * mean1, 0.0)
    scale1 = params["bn1_gamma"] / jnp.sqrt(var1 + eps)
    shift1 = params["bn1_beta"] - mean1 * scale1

    # conv1: fused BN1+LReLU, single-K matmul, fused BN2 partial statistics.
    w1 = jnp.transpose(params["w1"], (0, 2, 3, 1)).reshape(Cout, 9 * Cin)
    y1, ps2, pq2 = _conv1(
        x, colmask,
        scale1.reshape(Cin, 1).astype(jnp.float32),
        shift1.reshape(Cin, 1).astype(jnp.float32),
        w1.astype(jnp.bfloat16),
        params["b1"].reshape(Cout, 1).astype(jnp.float32),
        W=W)

    # BN2 scale/shift from the fused per-image f32 partial sums.
    cnt2 = N * HW
    mean2 = jnp.sum(ps2[:, :, 0], axis=0) / cnt2
    var2 = jnp.maximum(jnp.sum(pq2[:, :, 0], axis=0) / cnt2 - mean2 * mean2, 0.0)
    scale2 = params["bn2_gamma"] / jnp.sqrt(var2 + eps)
    shift2 = params["bn2_beta"] - mean2 * scale2

    # conv2 with fused BN2+LReLU, fused 1x1 skip conv of the raw input,
    # and the combined conv2+skip bias.
    w2 = jnp.transpose(params["w2"], (0, 2, 3, 1)).reshape(Cout, 9 * Cout)
    ws = params["ws"].reshape(Cout, Cin)
    bias = (params["b2"] + params["bs"]).reshape(Cout, 1).astype(jnp.float32)
    out = _conv2_skip(
        y1, x, colmask,
        scale2.reshape(Cout, 1).astype(jnp.float32),
        shift2.reshape(Cout, 1).astype(jnp.float32),
        w2.astype(jnp.bfloat16), ws.astype(jnp.bfloat16), bias, W=W)

    return out.reshape(N, Cout, H, W)        # free reshape back to NCHW


# --------------------------- pure-JAX reference ------------------------------

def _ref_forward(x, params, stride=1, eps=1e-5):
    """Pure-XLA reference.  Conv inputs/weights are rounded to bf16 (with f32
    accumulation) and the conv1 intermediate is rounded to bf16, to match the
    kernel's MXU input precision and bf16 y1 storage."""
    def bn_lrelu(z, g, b):
        mean = jnp.mean(z, axis=(0, 2, 3), keepdims=True)
        var = jnp.mean((z - mean) ** 2, axis=(0, 2, 3), keepdims=True)
        y = (z - mean) / jnp.sqrt(var + eps) * g[None, :, None, None] \
            + b[None, :, None, None]
        return jnp.where(y >= 0, y, 0.2 * y)

    def conv(z, w, b, st, pad):
        y = jax.lax.conv_general_dilated(
            z.astype(jnp.bfloat16), w.astype(jnp.bfloat16), (st, st),
            [(pad, pad), (pad, pad)],
            dimension_numbers=("NCHW", "OIHW", "NCHW"),
            preferred_element_type=jnp.float32)
        return y + b[None, :, None, None]

    a1 = bn_lrelu(x, params["bn1_gamma"], params["bn1_beta"])
    y1 = conv(a1, params["w1"], params["b1"], stride, 1)
    y1 = y1.astype(jnp.bfloat16).astype(jnp.float32)   # match bf16 y1 storage
    a2 = bn_lrelu(y1, params["bn2_gamma"], params["bn2_beta"])
    y2 = conv(a2, params["w2"], params["b2"], 1, 1)
    s = conv(x, params["ws"], params["bs"], stride, 0)
    return y2 + s


# ---------------------------------- main -------------------------------------

if __name__ == "__main__":
    key = jax.random.PRNGKey(0)
    N, Cin, Cout, H, W, stride = 2, 4, 8, 16, 16, 1

    ks = jax.random.split(key, 10)
    params = {
        "bn1_gamma": 1.0 + 0.1 * jax.random.normal(ks[0], (Cin,), jnp.float32),
        "bn1_beta": 0.1 * jax.random.normal(ks[1], (Cin,), jnp.float32),
        "w1": 0.2 * jax.random.normal(ks[2], (Cout, Cin, 3, 3), jnp.float32),
        "b1": 0.1 * jax.random.normal(ks[3], (Cout,), jnp.float32),
        "bn2_gamma": 1.0 + 0.1 * jax.random.normal(ks[4], (Cout,), jnp.float32),
        "bn2_beta": 0.1 * jax.random.normal(ks[5], (Cout,), jnp.float32),
        "w2": 0.2 * jax.random.normal(ks[6], (Cout, Cout, 3, 3), jnp.float32),
        "b2": 0.1 * jax.random.normal(ks[7], (Cout,), jnp.float32),
        "ws": 0.2 * jax.random.normal(ks[8], (Cout, Cin, 1, 1), jnp.float32),
        "bs": 0.05 * jax.random.normal(ks[9], (Cout,), jnp.float32),
    }

    x = jax.random.normal(jax.random.fold_in(key, 123), (N, Cin, H, W),
                          jnp.float32)

    out = jax.block_until_ready(residual_unit2_forward(x, params, stride=stride))
    ref = jax.block_until_ready(_ref_forward(x, params, stride=stride))

    assert out.shape == (N, Cout, H, W), out.shape
    # Tolerance sized for bf16 MXU-input rounding + bf16 y1 storage (both paths
    # use bf16 conv operands and a bf16-rounded conv1 intermediate).
    max_err = float(jnp.max(jnp.abs(out - ref)))
    assert jnp.allclose(out, ref, atol=1e-2, rtol=1e-2), max_err

    print("KERNEL_OK")
</pallas_src>

<mosaic_0001>
module attributes {stable_mosaic.version = 11 : i64} {
  func.func @_conv1_kernel(%arg0: i32, %arg1: memref<1x4x256xf32, #tpu.memory_space<vmem>>, %arg2: memref<2x256xbf16, #tpu.memory_space<vmem>>, %arg3: memref<4x1xf32, #tpu.memory_space<vmem>>, %arg4: memref<4x1xf32, #tpu.memory_space<vmem>>, %arg5: memref<8x36xbf16, #tpu.memory_space<vmem>>, %arg6: memref<8x1xf32, #tpu.memory_space<vmem>>, %arg7: memref<1x8x256xbf16, #tpu.memory_space<vmem>>, %arg8: memref<1x8x1xf32, #tpu.memory_space<vmem>>, %arg9: memref<1x8x1xf32, #tpu.memory_space<vmem>>, %arg10: memref<4x512xbf16, #tpu.memory_space<vmem>>, %arg11: memref<36x256xbf16, #tpu.memory_space<vmem>>) attributes {dimension_semantics = [#tpu.dimension_semantics<parallel>], iteration_bounds = array<i64: 2>, scalar_prefetch = 0 : i64, scratch_operands = 2 : i64, tpu.core_type = #tpu.core_type<tc>, window_params = [{transform_indices = @transform_0, window_bounds = array<i64: 1, 4, 256>}, {pipeline_mode = #tpu.pipeline_mode<synchronous>, transform_indices = @transform_1, window_bounds = array<i64: 2, 256>}, {pipeline_mode = #tpu.pipeline_mode<synchronous>, transform_indices = @transform_2, window_bounds = array<i64: 4, 1>}, {pipeline_mode = #tpu.pipeline_mode<synchronous>, transform_indices = @transform_3, window_bounds = array<i64: 4, 1>}, {pipeline_mode = #tpu.pipeline_mode<synchronous>, transform_indices = @transform_4, window_bounds = array<i64: 8, 36>}, {pipeline_mode = #tpu.pipeline_mode<synchronous>, transform_indices = @transform_5, window_bounds = array<i64: 8, 1>}, {transform_indices = @transform_6, window_bounds = array<i64: 1, 8, 256>}, {transform_indices = @transform_7, window_bounds = array<i64: 1, 8, 1>}, {transform_indices = @transform_8, window_bounds = array<i64: 1, 8, 1>}]} {
    %c0 = arith.constant 0 : index
    %c0_0 = arith.constant 0 : index
    %c0_1 = arith.constant 0 : index
    %0 = vector.load %arg1[%c0, %c0_0, %c0_1] : memref<1x4x256xf32, #tpu.memory_space<vmem>>, vector<1x4x256xf32>
    %1 = vector.shape_cast %0 : vector<1x4x256xf32> to vector<4x256xf32>
    %c0_2 = arith.constant 0 : index
    %c0_3 = arith.constant 0 : index
    %2 = vector.load %arg3[%c0_2, %c0_3] : memref<4x1xf32, #tpu.memory_space<vmem>>, vector<4x1xf32>
    %3 = vector.broadcast %2 : vector<4x1xf32> to vector<4x256xf32>
    %4 = arith.mulf %1, %3 : vector<4x256xf32>
    %c0_4 = arith.constant 0 : index
    %c0_5 = arith.constant 0 : index
    %5 = vector.load %arg4[%c0_4, %c0_5] : memref<4x1xf32, #tpu.memory_space<vmem>>, vector<4x1xf32>
    %6 = vector.broadcast %5 : vector<4x1xf32> to vector<4x256xf32>
    %7 = arith.addf %4, %6 : vector<4x256xf32>
    %cst = arith.constant 0.000000e+00 : f32
    %8 = vector.broadcast %cst : f32 to vector<4x256xf32>
    %9 = arith.cmpf oge, %7, %8 : vector<4x256xf32>
    %cst_6 = arith.constant 2.000000e-01 : f32
    %10 = vector.broadcast %cst_6 : f32 to vector<4x256xf32>
    %11 = arith.mulf %10, %7 : vector<4x256xf32>
    %12 = arith.select %9, %7, %11 : vector<4x256xi1>, vector<4x256xf32>
    %cst_7 = arith.constant 0.000000e+00 : bf16
    %13 = vector.broadcast %cst_7 : bf16 to vector<4x17xbf16>
    %c0_8 = arith.constant 0 : index
    %c111 = arith.constant 111 : index
    %14 = vector.load %arg10[%c0_8, %c111] : memref<4x512xbf16, #tpu.memory_space<vmem>>, vector<4x17xbf16>
    tpu.vector_store %arg10[%c0_8, %c111], %13 {strides = array<i32>} : memref<4x512xbf16, #tpu.memory_space<vmem>>, vector<4x17xbf16>,
    %c0_9 = arith.constant 0 : index
    %c384 = arith.constant 384 : index
    %15 = vector.load %arg10[%c0_9, %c384] : memref<4x512xbf16, #tpu.memory_space<vmem>>, vector<4x17xbf16>
    tpu.vector_store %arg10[%c0_9, %c384], %13 {strides = array<i32>} : memref<4x512xbf16, #tpu.memory_space<vmem>>, vector<4x17xbf16>,
    %16 = arith.truncf %12 : vector<4x256xf32> to vector<4x256xbf16>
    %c0_10 = arith.constant 0 : index
    %c128 = arith.constant 128 : index
    %17 = vector.load %arg10[%c0_10, %c128] : memref<4x512xbf16, #tpu.memory_space<vmem>>, vector<4x256xbf16>
    tpu.vector_store %arg10[%c0_10, %c128], %16 {strides = array<i32>} : memref<4x512xbf16, #tpu.memory_space<vmem>>, vector<4x256xbf16>,
    %c0_11 = arith.constant 0 : index
    %c0_12 = arith.constant 0 : index
    %18 = vector.load %arg10[%c0_11, %c0_12] : memref<4x512xbf16, #tpu.memory_space<vmem>>, vector<4x512xbf16>
    %c0_13 = arith.constant 0 : index
    %c0_14 = arith.constant 0 : index
    %19 = vector.load %arg2[%c0_13, %c0_14] : memref<2x256xbf16, #tpu.memory_space<vmem>>, vector<1x256xbf16>
    %c1 = arith.constant 1 : index
    %c0_15 = arith.constant 0 : index
    %20 = vector.load %arg2[%c1, %c0_15] : memref<2x256xbf16, #tpu.memory_space<vmem>>, vector<1x256xbf16>
    %21 = vector.extract_strided_slice %18 {offsets = [0, 111], sizes = [4, 256], strides = [1, 1]} : vector<4x512xbf16> to vector<4x256xbf16>
    %22 = vector.broadcast %19 : vector<1x256xbf16> to vector<4x256xbf16>
    %23 = arith.mulf %21, %22 : vector<4x256xbf16>
    %c0_16 = arith.constant 0 : index
    %c0_17 = arith.constant 0 : index
    %24 = vector.load %arg11[%c0_16, %c0_17] : memref<36x256xbf16, #tpu.memory_space<vmem>>, vector<4x256xbf16>
    tpu.vector_store %arg11[%c0_16, %c0_17], %23 {strides = array<i32>} : memref<36x256xbf16, #tpu.memory_space<vmem>>, vector<4x256xbf16>,
    %25 = vector.extract_strided_slice %18 {offsets = [0, 112], sizes = [4, 256], strides = [1, 1]} : vector<4x512xbf16> to vector<4x256xbf16>
    %c4 = arith.constant 4 : index
    %c0_18 = arith.constant 0 : index
    %26 = vector.load %arg11[%c4, %c0_18] : memref<36x256xbf16, #tpu.memory_space<vmem>>, vector<4x256xbf16>
    tpu.vector_store %arg11[%c4, %c0_18], %25 {strides = array<i32>} : memref<36x256xbf16, #tpu.memory_space<vmem>>, vector<4x256xbf16>,
    %27 = vector.extract_strided_slice %18 {offsets = [0, 113], sizes = [4, 256], strides = [1, 1]} : vector<4x512xbf16> to vector<4x256xbf16>
    %28 = vector.broadcast %20 : vector<1x256xbf16> to vector<4x256xbf16>
    %29 = arith.mulf %27, %28 : vector<4x256xbf16>
    %c8 = arith.constant 8 : index
    %c0_19 = arith.constant 0 : index
    %30 = vector.load %arg11[%c8, %c0_19] : memref<36x256xbf16, #tpu.memory_space<vmem>>, vector<4x256xbf16>
    tpu.vector_store %arg11[%c8, %c0_19], %29 {strides = array<i32>} : memref<36x256xbf16, #tpu.memory_space<vmem>>, vector<4x256xbf16>,
    %31 = vector.extract_strided_slice %18 {offsets = [0, 127], sizes = [4, 256], strides = [1, 1]} : vector<4x512xbf16> to vector<4x256xbf16>
    %32 = vector.broadcast %19 : vector<1x256xbf16> to vector<4x256xbf16>
    %33 = arith.mulf %31, %32 : vector<4x256xbf16>
    %c12 = arith.constant 12 : index
    %c0_20 = arith.constant 0 : index
    %34 = vector.load %arg11[%c12, %c0_20] : memref<36x256xbf16, #tpu.memory_space<vmem>>, vector<4x256xbf16>
    tpu.vector_store %arg11[%c12, %c0_20], %33 {strides = array<i32>} : memref<36x256xbf16, #tpu.memory_space<vmem>>, vector<4x256xbf16>,
    %35 = vector.extract_strided_slice %18 {offsets = [0, 128], sizes = [4, 256], strides = [1, 1]} : vector<4x512xbf16> to vector<4x256xbf16>
    %c16 = arith.constant 16 : index
    %c0_21 = arith.constant 0 : index
    %36 = vector.load %arg11[%c16, %c0_21] : memref<36x256xbf16, #tpu.memory_space<vmem>>, vector<4x256xbf16>
    tpu.vector_store %arg11[%c16, %c0_21], %35 {strides = array<i32>} : memref<36x256xbf16, #tpu.memory_space<vmem>>, vector<4x256xbf16>,
    %37 = vector.extract_strided_slice %18 {offsets = [0, 129], sizes = [4, 256], strides = [1, 1]} : vector<4x512xbf16> to vector<4x256xbf16>
    %38 = vector.broadcast %20 : vector<1x256xbf16> to vector<4x256xbf16>
    %39 = arith.mulf %37, %38 : vector<4x256xbf16>
    %c20 = arith.constant 20 : index
    %c0_22 = arith.constant 0 : index
    %40 = vector.load %arg11[%c20, %c0_22] : memref<36x256xbf16, #tpu.memory_space<vmem>>, vector<4x256xbf16>
    tpu.vector_store %arg11[%c20, %c0_22], %39 {strides = array<i32>} : memref<36x256xbf16, #tpu.memory_space<vmem>>, vector<4x256xbf16>,
    %41 = vector.extract_strided_slice %18 {offsets = [0, 143], sizes = [4, 256], strides = [1, 1]} : vector<4x512xbf16> to vector<4x256xbf16>
    %42 = vector.broadcast %19 : vector<1x256xbf16> to vector<4x256xbf16>
    %43 = arith.mulf %41, %42 : vector<4x256xbf16>
    %c24 = arith.constant 24 : index
    %c0_23 = arith.constant 0 : index
    %44 = vector.load %arg11[%c24, %c0_23] : memref<36x256xbf16, #tpu.memory_space<vmem>>, vector<4x256xbf16>
    tpu.vector_store %arg11[%c24, %c0_23], %43 {strides = array<i32>} : memref<36x256xbf16, #tpu.memory_space<vmem>>, vector<4x256xbf16>,
    %45 = vector.extract_strided_slice %18 {offsets = [0, 144], sizes = [4, 256], strides = [1, 1]} : vector<4x512xbf16> to vector<4x256xbf16>
    %c28 = arith.constant 28 : index
    %c0_24 = arith.constant 0 : index
    %46 = vector.load %arg11[%c28, %c0_24] : memref<36x256xbf16, #tpu.memory_space<vmem>>, vector<4x256xbf16>
    tpu.vector_store %arg11[%c28, %c0_24], %45 {strides = array<i32>} : memref<36x256xbf16, #tpu.memory_space<vmem>>, vector<4x256xbf16>,
    %47 = vector.extract_strided_slice %18 {offsets = [0, 145], sizes = [4, 256], strides = [1, 1]} : vector<4x512xbf16> to vector<4x256xbf16>
    %48 = vector.broadcast %20 : vector<1x256xbf16> to vector<4x256xbf16>
    %49 = arith.mulf %47, %48 : vector<4x256xbf16>
    %c32 = arith.constant 32 : index
    %c0_25 = arith.constant 0 : index
    %50 = vector.load %arg11[%c32, %c0_25] : memref<36x256xbf16, #tpu.memory_space<vmem>>, vector<4x256xbf16>
    tpu.vector_store %arg11[%c32, %c0_25], %49 {strides = array<i32>} : memref<36x256xbf16, #tpu.memory_space<vmem>>, vector<4x256xbf16>,
    %c0_26 = arith.constant 0 : index
    %c0_27 = arith.constant 0 : index
    %51 = vector.load %arg5[%c0_26, %c0_27] : memref<8x36xbf16, #tpu.memory_space<vmem>>, vector<8x36xbf16>
    %c0_28 = arith.constant 0 : index
    %c0_29 = arith.constant 0 : index
    %52 = vector.load %arg11[%c0_28, %c0_29] : memref<36x256xbf16, #tpu.memory_space<vmem>>, vector<36x256xbf16>
    %cst_30 = arith.constant dense<0.000000e+00> : vector<8x256xf32>
    %53 = tpu.matmul %51, %52, %cst_30 {dimension_numbers = #tpu.dot_dimension_numbers<[1], [0], [0], [1], [0, 0, 1, 1], [], []>} : vector<8x36xbf16>, vector<36x256xbf16>, vector<8x256xf32> -> vector<8x256xf32>
    %c0_31 = arith.constant 0 : index
    %c0_32 = arith.constant 0 : index
    %54 = vector.load %arg6[%c0_31, %c0_32] : memref<8x1xf32, #tpu.memory_space<vmem>>, vector<8x1xf32>
    %55 = vector.broadcast %54 : vector<8x1xf32> to vector<8x256xf32>
    %56 = arith.addf %53, %55 : vector<8x256xf32>
    %57 = arith.truncf %56 : vector<8x256xf32> to vector<8x256xbf16>
    %c0_33 = arith.constant 0 : index
    %c0_34 = arith.constant 0 : index
    %c0_35 = arith.constant 0 : index
    %58 = vector.load %arg7[%c0_33, %c0_34, %c0_35] : memref<1x8x256xbf16, #tpu.memory_space<vmem>>, vector<1x8x256xbf16>
    %59 = vector.shape_cast %58 : vector<1x8x256xbf16> to vector<8x256xbf16>
    %60 = vector.shape_cast %57 : vector<8x256xbf16> to vector<1x8x256xbf16>
    tpu.vector_store %arg7[%c0_33, %c0_34, %c0_35], %60 {strides = array<i32>} : memref<1x8x256xbf16, #tpu.memory_space<vmem>>, vector<1x8x256xbf16>,
    %cst_36 = arith.constant dense<0.000000e+00> : vector<8xf32>
    %61 = vector.multi_reduction <add>, %56, %cst_36 [1] : vector<8x256xf32> to vector<8xf32>
    %62 = vector.shape_cast %61 : vector<8xf32> to vector<8x1xf32>
    %c0_37 = arith.constant 0 : index
    %c0_38 = arith.constant 0 : index
    %c0_39 = arith.constant 0 : index
    %63 = vector.load %arg8[%c0_37, %c0_38, %c0_39] : memref<1x8x1xf32, #tpu.memory_space<vmem>>, vector<1x8x1xf32>
    %64 = vector.shape_cast %63 : vector<1x8x1xf32> to vector<8x1xf32>
    %65 = vector.shape_cast %62 : vector<8x1xf32> to vector<1x8x1xf32>
    tpu.vector_store %arg8[%c0_37, %c0_38, %c0_39], %65 {strides = array<i32>} : memref<1x8x1xf32, #tpu.memory_space<vmem>>, vector<1x8x1xf32>,
    %66 = arith.mulf %56, %56 : vector<8x256xf32>
    %cst_40 = arith.constant dense<0.000000e+00> : vector<8xf32>
    %67 = vector.multi_reduction <add>, %66, %cst_40 [1] : vector<8x256xf32> to vector<8xf32>
    %68 = vector.shape_cast %67 : vector<8xf32> to vector<8x1xf32>
    %c0_41 = arith.constant 0 : index
    %c0_42 = arith.constant 0 : index
    %c0_43 = arith.constant 0 : index
    %69 = vector.load %arg9[%c0_41, %c0_42, %c0_43] : memref<1x8x1xf32, #tpu.memory_space<vmem>>, vector<1x8x1xf32>
    %70 = vector.shape_cast %69 : vector<1x8x1xf32> to vector<8x1xf32>
    %71 = vector.shape_cast %68 : vector<8x1xf32> to vector<1x8x1xf32>
    tpu.vector_store %arg9[%c0_41, %c0_42, %c0_43], %71 {strides = array<i32>} : memref<1x8x1xf32, #tpu.memory_space<vmem>>, vector<1x8x1xf32>,
    return
  }
  func.func @transform_0(%arg0: i32) -> (i32, i32, i32) {
    %c0_i32 = arith.constant 0 : i32
    %c0_i32_0 = arith.constant 0 : i32
    %c0_i32_1 = arith.constant 0 : i32
    return %arg0, %c0_i32, %c0_i32_0 : i32, i32, i32
  }
  func.func @transform_1(%arg0: i32) -> (i32, i32) {
    %c0_i32 = arith.constant 0 : i32
    %c0_i32_0 = arith.constant 0 : i32
    %c0_i32_1 = arith.constant 0 : i32
    return %c0_i32, %c0_i32_0 : i32, i32
  }
  func.func @transform_2(%arg0: i32) -> (i32, i32) {
    %c0_i32 = arith.constant 0 : i32
    %c0_i32_0 = arith.constant 0 : i32
    %c0_i32_1 = arith.constant 0 : i32
    return %c0_i32, %c0_i32_0 : i32, i32
  }
  func.func @transform_3(%arg0: i32) -> (i32, i32) {
    %c0_i32 = arith.constant 0 : i32
    %c0_i32_0 = arith.constant 0 : i32
    %c0_i32_1 = arith.constant 0 : i32
    return %c0_i32, %c0_i32_0 : i32, i32
  }
  func.func @transform_4(%arg0: i32) -> (i32, i32) {
    %c0_i32 = arith.constant 0 : i32
    %c0_i32_0 = arith.constant 0 : i32
    %c0_i32_1 = arith.constant 0 : i32
    return %c0_i32, %c0_i32_0 : i32, i32
  }
  func.func @transform_5(%arg0: i32) -> (i32, i32) {
    %c0_i32 = arith.constant 0 : i32
    %c0_i32_0 = arith.constant 0 : i32
    %c0_i32_1 = arith.constant 0 : i32
    return %c0_i32, %c0_i32_0 : i32, i32
  }
  func.func @transform_6(%arg0: i32) -> (i32, i32, i32) {
    %c0_i32 = arith.constant 0 : i32
    %c0_i32_0 = arith.constant 0 : i32
    %c0_i32_1 = arith.constant 0 : i32
    return %arg0, %c0_i32, %c0_i32_0 : i32, i32, i32
  }
  func.func @transform_7(%arg0: i32) -> (i32, i32, i32) {
    %c0_i32 = arith.constant 0 : i32
    %c0_i32_0 = arith.constant 0 : i32
    %c0_i32_1 = arith.constant 0 : i32
    return %arg0, %c0_i32, %c0_i32_0 : i32, i32, i32
  }
  func.func @transform_8(%arg0: i32) -> (i32, i32, i32) {
    %c0_i32 = arith.constant 0 : i32
    %c0_i32_0 = arith.constant 0 : i32
    %c0_i32_1 = arith.constant 0 : i32
    return %arg0, %c0_i32, %c0_i32_0 : i32, i32, i32
  }
}

module attributes {stable_mosaic.version = 11 : i64} {
  func.func @_conv2_kernel(%arg0: i32, %arg1: memref<1x8x256xbf16, #tpu.memory_space<vmem>>, %arg2: memref<1x4x256xf32, #tpu.memory_space<vmem>>, %arg3: memref<2x256xbf16, #tpu.memory_space<vmem>>, %arg4: memref<8x1xf32, #tpu.memory_space<vmem>>, %arg5: memref<8x1xf32, #tpu.memory_space<vmem>>, %arg6: memref<8x72xbf16, #tpu.memory_space<vmem>>, %arg7: memref<8x4xbf16, #tpu.memory_space<vmem>>, %arg8: memref<8x1xf32, #tpu.memory_space<vmem>>, %arg9: memref<1x8x256xf32, #tpu.memory_space<vmem>>, %arg10: memref<8x512xbf16, #tpu.memory_space<vmem>>, %arg11: memref<72x256xbf16, #tpu.memory_space<vmem>>) attributes {dimension_semantics = [#tpu.dimension_semantics<parallel>], iteration_bounds = array<i64: 2>, scalar_prefetch = 0 : i64, scratch_operands = 2 : i64, tpu.core_type = #tpu.core_type<tc>, window_params = [{transform_indices = @transform_0, window_bounds = array<i64: 1, 8, 256>}, {transform_indices = @transform_1, window_bounds = array<i64: 1, 4, 256>}, {pipeline_mode = #tpu.pipeline_mode<synchronous>, transform_indices = @transform_2, window_bounds = array<i64: 2, 256>}, {pipeline_mode = #tpu.pipeline_mode<synchronous>, transform_indices = @transform_3, window_bounds = array<i64: 8, 1>}, {pipeline_mode = #tpu.pipeline_mode<synchronous>, transform_indices = @transform_4, window_bounds = array<i64: 8, 1>}, {pipeline_mode = #tpu.pipeline_mode<synchronous>, transform_indices = @transform_5, window_bounds = array<i64: 8, 72>}, {pipeline_mode = #tpu.pipeline_mode<synchronous>, transform_indices = @transform_6, window_bounds = array<i64: 8, 4>}, {pipeline_mode = #tpu.pipeline_mode<synchronous>, transform_indices = @transform_7, window_bounds = array<i64: 8, 1>}, {transform_indices = @transform_8, window_bounds = array<i64: 1, 8, 256>}]} {
    %c0 = arith.constant 0 : index
    %c0_0 = arith.constant 0 : index
    %c0_1 = arith.constant 0 : index
    %0 = vector.load %arg1[%c0, %c0_0, %c0_1] : memref<1x8x256xbf16, #tpu.memory_space<vmem>>, vector<1x8x256xbf16>
    %1 = vector.shape_cast %0 : vector<1x8x256xbf16> to vector<8x256xbf16>
    %2 = arith.extf %1 : vector<8x256xbf16> to vector<8x256xf32>
    %c0_2 = arith.constant 0 : index
    %c0_3 = arith.constant 0 : index
    %3 = vector.load %arg4[%c0_2, %c0_3] : memref<8x1xf32, #tpu.memory_space<vmem>>, vector<8x1xf32>
    %4 = vector.broadcast %3 : vector<8x1xf32> to vector<8x256xf32>
    %5 = arith.mulf %2, %4 : vector<8x256xf32>
    %c0_4 = arith.constant 0 : index
    %c0_5 = arith.constant 0 : index
    %6 = vector.load %arg5[%c0_4, %c0_5] : memref<8x1xf32, #tpu.memory_space<vmem>>, vector<8x1xf32>
    %7 = vector.broadcast %6 : vector<8x1xf32> to vector<8x256xf32>
    %8 = arith.addf %5, %7 : vector<8x256xf32>
    %cst = arith.constant 0.000000e+00 : f32
    %9 = vector.broadcast %cst : f32 to vector<8x256xf32>
    %10 = arith.cmpf oge, %8, %9 : vector<8x256xf32>
    %cst_6 = arith.constant 2.000000e-01 : f32
    %11 = vector.broadcast %cst_6 : f32 to vector<8x256xf32>
    %12 = arith.mulf %11, %8 : vector<8x256xf32>
    %13 = arith.select %10, %8, %12 : vector<8x256xi1>, vector<8x256xf32>
    %cst_7 = arith.constant 0.000000e+00 : bf16
    %14 = vector.broadcast %cst_7 : bf16 to vector<8x17xbf16>
    %c0_8 = arith.constant 0 : index
    %c111 = arith.constant 111 : index
    %15 = vector.load %arg10[%c0_8, %c111] : memref<8x512xbf16, #tpu.memory_space<vmem>>, vector<8x17xbf16>
    tpu.vector_store %arg10[%c0_8, %c111], %14 {strides = array<i32>} : memref<8x512xbf16, #tpu.memory_space<vmem>>, vector<8x17xbf16>,
    %c0_9 = arith.constant 0 : index
    %c384 = arith.constant 384 : index
    %16 = vector.load %arg10[%c0_9, %c384] : memref<8x512xbf16, #tpu.memory_space<vmem>>, vector<8x17xbf16>
    tpu.vector_store %arg10[%c0_9, %c384], %14 {strides = array<i32>} : memref<8x512xbf16, #tpu.memory_space<vmem>>, vector<8x17xbf16>,
    %17 = arith.truncf %13 : vector<8x256xf32> to vector<8x256xbf16>
    %c0_10 = arith.constant 0 : index
    %c128 = arith.constant 128 : index
    %18 = vector.load %arg10[%c0_10, %c128] : memref<8x512xbf16, #tpu.memory_space<vmem>>, vector<8x256xbf16>
    tpu.vector_store %arg10[%c0_10, %c128], %17 {strides = array<i32>} : memref<8x512xbf16, #tpu.memory_space<vmem>>, vector<8x256xbf16>,
    %c0_11 = arith.constant 0 : index
    %c0_12 = arith.constant 0 : index
    %19 = vector.load %arg10[%c0_11, %c0_12] : memref<8x512xbf16, #tpu.memory_space<vmem>>, vector<8x512xbf16>
    %c0_13 = arith.constant 0 : index
    %c0_14 = arith.constant 0 : index
    %20 = vector.load %arg3[%c0_13, %c0_14] : memref<2x256xbf16, #tpu.memory_space<vmem>>, vector<1x256xbf16>
    %c1 = arith.constant 1 : index
    %c0_15 = arith.constant 0 : index
    %21 = vector.load %arg3[%c1, %c0_15] : memref<2x256xbf16, #tpu.memory_space<vmem>>, vector<1x256xbf16>
    %22 = vector.extract_strided_slice %19 {offsets = [0, 111], sizes = [8, 256], strides = [1, 1]} : vector<8x512xbf16> to vector<8x256xbf16>
    %23 = vector.broadcast %20 : vector<1x256xbf16> to vector<8x256xbf16>
    %24 = arith.mulf %22, %23 : vector<8x256xbf16>
    %c0_16 = arith.constant 0 : index
    %c0_17 = arith.constant 0 : index
    %25 = vector.load %arg11[%c0_16, %c0_17] : memref<72x256xbf16, #tpu.memory_space<vmem>>, vector<8x256xbf16>
    tpu.vector_store %arg11[%c0_16, %c0_17], %24 {strides = array<i32>} : memref<72x256xbf16, #tpu.memory_space<vmem>>, vector<8x256xbf16>,
    %26 = vector.extract_strided_slice %19 {offsets = [0, 112], sizes = [8, 256], strides = [1, 1]} : vector<8x512xbf16> to vector<8x256xbf16>
    %c8 = arith.constant 8 : index
    %c0_18 = arith.constant 0 : index
    %27 = vector.load %arg11[%c8, %c0_18] : memref<72x256xbf16, #tpu.memory_space<vmem>>, vector<8x256xbf16>
    tpu.vector_store %arg11[%c8, %c0_18], %26 {strides = array<i32>} : memref<72x256xbf16, #tpu.memory_space<vmem>>, vector<8x256xbf16>,
    %28 = vector.extract_strided_slice %19 {offsets = [0, 113], sizes = [8, 256], strides = [1, 1]} : vector<8x512xbf16> to vector<8x256xbf16>
    %29 = vector.broadcast %21 : vector<1x256xbf16> to vector<8x256xbf16>
    %30 = arith.mulf %28, %29 : vector<8x256xbf16>
    %c16 = arith.constant 16 : index
    %c0_19 = arith.constant 0 : index
    %31 = vector.load %arg11[%c16, %c0_19] : memref<72x256xbf16, #tpu.memory_space<vmem>>, vector<8x256xbf16>
    tpu.vector_store %arg11[%c16, %c0_19], %30 {strides = array<i32>} : memref<72x256xbf16, #tpu.memory_space<vmem>>, vector<8x256xbf16>,
    %32 = vector.extract_strided_slice %19 {offsets = [0, 127], sizes = [8, 256], strides = [1, 1]} : vector<8x512xbf16> to vector<8x256xbf16>
    %33 = vector.broadcast %20 : vector<1x256xbf16> to vector<8x256xbf16>
    %34 = arith.mulf %32, %33 : vector<8x256xbf16>
    %c24 = arith.constant 24 : index
    %c0_20 = arith.constant 0 : index
    %35 = vector.load %arg11[%c24, %c0_20] : memref<72x256xbf16, #tpu.memory_space<vmem>>, vector<8x256xbf16>
    tpu.vector_store %arg11[%c24, %c0_20], %34 {strides = array<i32>} : memref<72x256xbf16, #tpu.memory_space<vmem>>, vector<8x256xbf16>,
    %36 = vector.extract_strided_slice %19 {offsets = [0, 128], sizes = [8, 256], strides = [1, 1]} : vector<8x512xbf16> to vector<8x256xbf16>
    %c32 = arith.constant 32 : index
    %c0_21 = arith.constant 0 : index
    %37 = vector.load %arg11[%c32, %c0_21] : memref<72x256xbf16, #tpu.memory_space<vmem>>, vector<8x256xbf16>
    tpu.vector_store %arg11[%c32, %c0_21], %36 {strides = array<i32>} : memref<72x256xbf16, #tpu.memory_space<vmem>>, vector<8x256xbf16>,
    %38 = vector.extract_strided_slice %19 {offsets = [0, 129], sizes = [8, 256], strides = [1, 1]} : vector<8x512xbf16> to vector<8x256xbf16>
    %39 = vector.broadcast %21 : vector<1x256xbf16> to vector<8x256xbf16>
    %40 = arith.mulf %38, %39 : vector<8x256xbf16>
    %c40 = arith.constant 40 : index
    %c0_22 = arith.constant 0 : index
    %41 = vector.load %arg11[%c40, %c0_22] : memref<72x256xbf16, #tpu.memory_space<vmem>>, vector<8x256xbf16>
    tpu.vector_store %arg11[%c40, %c0_22], %40 {strides = array<i32>} : memref<72x256xbf16, #tpu.memory_space<vmem>>, vector<8x256xbf16>,
    %42 = vector.extract_strided_slice %19 {offsets = [0, 143], sizes = [8, 256], strides = [1, 1]} : vector<8x512xbf16> to vector<8x256xbf16>
    %43 = vector.broadcast %20 : vector<1x256xbf16> to vector<8x256xbf16>
    %44 = arith.mulf %42, %43 : vector<8x256xbf16>
    %c48 = arith.constant 48 : index
    %c0_23 = arith.constant 0 : index
    %45 = vector.load %arg11[%c48, %c0_23] : memref<72x256xbf16, #tpu.memory_space<vmem>>, vector<8x256xbf16>
    tpu.vector_store %arg11[%c48, %c0_23], %44 {strides = array<i32>} : memref<72x256xbf16, #tpu.memory_space<vmem>>, vector<8x256xbf16>,
    %46 = vector.extract_strided_slice %19 {offsets = [0, 144], sizes = [8, 256], strides = [1, 1]} : vector<8x512xbf16> to vector<8x256xbf16>
    %c56 = arith.constant 56 : index
    %c0_24 = arith.constant 0 : index
    %47 = vector.load %arg11[%c56, %c0_24] : memref<72x256xbf16, #tpu.memory_space<vmem>>, vector<8x256xbf16>
    tpu.vector_store %arg11[%c56, %c0_24], %46 {strides = array<i32>} : memref<72x256xbf16, #tpu.memory_space<vmem>>, vector<8x256xbf16>,
    %48 = vector.extract_strided_slice %19 {offsets = [0, 145], sizes = [8, 256], strides = [1, 1]} : vector<8x512xbf16> to vector<8x256xbf16>
    %49 = vector.broadcast %21 : vector<1x256xbf16> to vector<8x256xbf16>
    %50 = arith.mulf %48, %49 : vector<8x256xbf16>
    %c64 = arith.constant 64 : index
    %c0_25 = arith.constant 0 : index
    %51 = vector.load %arg11[%c64, %c0_25] : memref<72x256xbf16, #tpu.memory_space<vmem>>, vector<8x256xbf16>
    tpu.vector_store %arg11[%c64, %c0_25], %50 {strides = array<i32>} : memref<72x256xbf16, #tpu.memory_space<vmem>>, vector<8x256xbf16>,
    %c0_26 = arith.constant 0 : index
    %c0_27 = arith.constant 0 : index
    %52 = vector.load %arg6[%c0_26, %c0_27] : memref<8x72xbf16, #tpu.memory_space<vmem>>, vector<8x72xbf16>
    %c0_28 = arith.constant 0 : index
    %c0_29 = arith.constant 0 : index
    %53 = vector.load %arg11[%c0_28, %c0_29] : memref<72x256xbf16, #tpu.memory_space<vmem>>, vector<72x256xbf16>
    %cst_30 = arith.constant dense<0.000000e+00> : vector<8x256xf32>
    %54 = tpu.matmul %52, %53, %cst_30 {dimension_numbers = #tpu.dot_dimension_numbers<[1], [0], [0], [1], [0, 0, 1, 1], [], []>} : vector<8x72xbf16>, vector<72x256xbf16>, vector<8x256xf32> -> vector<8x256xf32>
    %c0_31 = arith.constant 0 : index
    %c0_32 = arith.constant 0 : index
    %55 = vector.load %arg7[%c0_31, %c0_32] : memref<8x4xbf16, #tpu.memory_space<vmem>>, vector<8x4xbf16>
    %c0_33 = arith.constant 0 : index
    %c0_34 = arith.constant 0 : index
    %c0_35 = arith.constant 0 : index
    %56 = vector.load %arg2[%c0_33, %c0_34, %c0_35] : memref<1x4x256xf32, #tpu.memory_space<vmem>>, vector<1x4x256xf32>
    %57 = vector.shape_cast %56 : vector<1x4x256xf32> to vector<4x256xf32>
    %58 = arith.truncf %57 : vector<4x256xf32> to vector<4x256xbf16>
    %cst_36 = arith.constant dense<0.000000e+00> : vector<8x256xf32>
    %59 = tpu.matmul %55, %58, %cst_36 {dimension_numbers = #tpu.dot_dimension_numbers<[1], [0], [0], [1], [0, 0, 1, 1], [], []>} : vector<8x4xbf16>, vector<4x256xbf16>, vector<8x256xf32> -> vector<8x256xf32>
    %60 = arith.addf %54, %59 : vector<8x256xf32>
    %c0_37 = arith.constant 0 : index
    %c0_38 = arith.constant 0 : index
    %61 = vector.load %arg8[%c0_37, %c0_38] : memref<8x1xf32, #tpu.memory_space<vmem>>, vector<8x1xf32>
    %62 = vector.broadcast %61 : vector<8x1xf32> to vector<8x256xf32>
    %63 = arith.addf %60, %62 : vector<8x256xf32>
    %c0_39 = arith.constant 0 : index
    %c0_40 = arith.constant 0 : index
    %c0_41 = arith.constant 0 : index
    %64 = vector.load %arg9[%c0_39, %c0_40, %c0_41] : memref<1x8x256xf32, #tpu.memory_space<vmem>>, vector<1x8x256xf32>
    %65 = vector.shape_cast %64 : vector<1x8x256xf32> to vector<8x256xf32>
    %66 = vector.shape_cast %63 : vector<8x256xf32> to vector<1x8x256xf32>
    tpu.vector_store %arg9[%c0_39, %c0_40, %c0_41], %66 {strides = array<i32>} : memref<1x8x256xf32, #tpu.memory_space<vmem>>, vector<1x8x256xf32>,
    return
  }
  func.func @transform_0(%arg0: i32) -> (i32, i32, i32) {
    %c0_i32 = arith.constant 0 : i32
    %c0_i32_0 = arith.constant 0 : i32
    %c0_i32_1 = arith.constant 0 : i32
    return %arg0, %c0_i32, %c0_i32_0 : i32, i32, i32
  }
  func.func @transform_1(%arg0: i32) -> (i32, i32, i32) {
    %c0_i32 = arith.constant 0 : i32
    %c0_i32_0 = arith.constant 0 : i32
    %c0_i32_1 = arith.constant 0 : i32
    return %arg0, %c0_i32, %c0_i32_0 : i32, i32, i32
  }
  func.func @transform_2(%arg0: i32) -> (i32, i32) {
    %c0_i32 = arith.constant 0 : i32
    %c0_i32_0 = arith.constant 0 : i32
    %c0_i32_1 = arith.constant 0 : i32
    return %c0_i32, %c0_i32_0 : i32, i32
  }
  func.func @transform_3(%arg0: i32) -> (i32, i32) {
    %c0_i32 = arith.constant 0 : i32
    %c0_i32_0 = arith.constant 0 : i32
    %c0_i32_1 = arith.constant 0 : i32
    return %c0_i32, %c0_i32_0 : i32, i32
  }
  func.func @transform_4(%arg0: i32) -> (i32, i32) {
    %c0_i32 = arith.constant 0 : i32
    %c0_i32_0 = arith.constant 0 : i32
    %c0_i32_1 = arith.constant 0 : i32
    return %c0_i32, %c0_i32_0 : i32, i32
  }
  func.func @transform_5(%arg0: i32) -> (i32, i32) {
    %c0_i32 = arith.constant 0 : i32
    %c0_i32_0 = arith.constant 0 : i32
    %c0_i32_1 = arith.constant 0 : i32
    return %c0_i32, %c0_i32_0 : i32, i32
  }
  func.func @transform_6(%arg0: i32) -> (i32, i32) {
    %c0_i32 = arith.constant 0 : i32
    %c0_i32_0 = arith.constant 0 : i32
    %c0_i32_1 = arith.constant 0 : i32
    return %c0_i32, %c0_i32_0 : i32, i32
  }
  func.func @transform_7(%arg0: i32) -> (i32, i32) {
    %c0_i32 = arith.constant 0 : i32
    %c0_i32_0 = arith.constant 0 : i32
    %c0_i32_1 = arith.constant 0 : i32
    return %c0_i32, %c0_i32_0 : i32, i32
  }
  func.func @transform_8(%arg0: i32) -> (i32, i32, i32) {
    %c0_i32 = arith.constant 0 : i32
    %c0_i32_0 = arith.constant 0 : i32
    %c0_i32_1 = arith.constant 0 : i32
    return %arg0, %c0_i32, %c0_i32_0 : i32, i32, i32
  }
}

</mosaic_0001>

<llo_original>
// kernel: residual_unit2_forward.2
$region0: #{residual_unit2_forward.2}
  #allocation0 [shape = 'u32[]', space=smem, size = 0x4, offset = 0x4, fixed_abs, tag = 'smem constant byte address 0x4 - core index']
  #allocation1 [shape = 'u32[144,128]{1,0:T(1,128)}', space=vmem, size = 0x12000, scoped, tag = 'internal scratch']
  #allocation2 [shape = 'bf16[4,512]{1,0:T(4,128)(2,1)}', space=vmem, size = 0x1000, scoped, tag = 'scratch operand']
  #allocation3 [shape = 'bf16[36,256]{1,0:T(8,128)(2,1)}', space=vmem, size = 0x5000, scoped, tag = 'scratch operand']
  %s0 = inlined_call_operand.vmem [shape: f32[2,4,256], index: 0, kind: input, shape index: {}]
  %s1 = inlined_call_operand.vmem [shape: bf16[2,256], index: 1, kind: input, shape index: {}]
  %s2 = inlined_call_operand.vmem [shape: f32[4,1], index: 2, kind: input, shape index: {}]
  %s3 = inlined_call_operand.vmem [shape: f32[4,1], index: 3, kind: input, shape index: {}]
  %s4 = inlined_call_operand.vmem [shape: bf16[8,36], index: 4, kind: input, shape index: {}]
  %s5 = inlined_call_operand.vmem [shape: f32[8,1], index: 5, kind: input, shape index: {}]
  %s6 = inlined_call_operand.vmem [shape: bf16[2,8,256], index: 6, kind: output, shape index: {0}]
  %s7 = inlined_call_operand.vmem [shape: f32[2,8,1], index: 7, kind: output, shape index: {1}]
  %s8 = inlined_call_operand.vmem [shape: f32[2,8,1], index: 8, kind: output, shape index: {2}]
  %9 = xla_tuple %s6, %s7, %s8
  %s10 = sld [smem:[#allocation0]]
  $region73: #{residual_unit2_forward.2} parent=0
    _
  %s12 = ssub.s32 1, %s10
  %s13 = scalar_select 0, %s12, %s10
  loop: start=0, step=1, limit=4
  $region2: #{residual_unit2_forward.2} parent=0 // loop_pre_header
    _
  $region3: #{residual_unit2_forward.2} parent=0 // loop_header
    %s15 = sphi 0, %s19
    %p16 = scmp.ge.s32.totalorder %s15, 4
    %s25 = sphi 0, %s27
    %s28 = sphi 0, %s25
    %s29 = sphi 0, %s28
    %s45 = sphi 0, %s29
    %s49 = sphi 0, %s49
    %s51 = sphi 0, %s49
    %s52 = sphi 0, %s51
    %s66 = sphi 0, %s52
    %s70 = sphi 0, %s70
    %s72 = sphi 0, %s70
    %s73 = sphi 0, %s72
    %s87 = sphi 0, %s73
    %s91 = sphi 0, %s91
    %s93 = sphi 0, %s91
    %s94 = sphi 0, %s93
    %s108 = sphi 0, %s94
    %s112 = sphi 0, %s112
    %s114 = sphi 0, %s112
    %s115 = sphi 0, %s114
    %s129 = sphi 0, %s115
    %s133 = sphi 0, %s133
    %s135 = sphi 0, %s133
    %s136 = sphi 0, %s135
    %s150 = sphi 0, %s136
    %s156 = sphi 0, %s158
    %s159 = sphi 0, %s156
    %s160 = sphi 0, %s159
    %s176 = sphi 0, %s160
    %s182 = sphi 0, %s184
    %s185 = sphi 0, %s182
    %s186 = sphi 0, %s185
    %s202 = sphi 0, %s186
    %s208 = sphi 0, %s210
    %s211 = sphi 0, %s208
    %s212 = sphi 0, %s211
    %s228 = sphi 0, %s212
  $region4: #{residual_unit2_forward.2} parent=0 // loop_header_branch
    %18 = sbr.rel (%p16) target = $region8
  $region5: #{residual_unit2_forward.2} parent=0 // loop_body
    %s20 = ssub.s32 %s15, 1
    %s21 = ssub.s32 %s15, 2
    %s22 = sadd.s32 %s15, 1
    %s23 = ssub.s32 %s15, %s22
    %p24 = scmp.eq.s32.totalorder %s23, 0
    %s26 = sadd.s32 %s25, 1
    %s27 = scalar_select %p24, %s25, %s26
    %p30 = pneg %p24
    %p31 = scmp.eq.s32.totalorder %s15, 1
    %p32 = por %p30, %p31
    %p33 = scmp.ne.s32.totalorder %s25, %s28
    %p34 = scmp.eq.s32.totalorder %s15, 0
    %p35 = por %p33, %p34
    %p36 = scmp.ne.s32.totalorder %s25, %s28
    %p37 = scmp.eq.s32.totalorder %s20, 1
    %p38 = por %p36, %p37
    %p39 = scmp.ne.s32.totalorder %s28, %s29
    %p40 = scmp.eq.s32.totalorder %s20, 0
    %p41 = por %p39, %p40
    %p42 = scmp.ne.s32.totalorder %s28, %s29
    %p43 = scmp.eq.s32.totalorder %s21, 1
    %p44 = por %p42, %p43
    %p46 = scmp.ne.s32.totalorder %s29, %s45
    %p47 = scmp.eq.s32.totalorder %s21, 0
    %p48 = por %p46, %p47
    %s50 = sadd.s32 %s49, 1
    %p53 = scmp.eq.s32.totalorder %s15, 1
    %p54 = scmp.ne.s32.totalorder %s49, %s51
    %p55 = scmp.eq.s32.totalorder %s15, 0
    %p56 = por %p54, %p55
    %p57 = scmp.ne.s32.totalorder %s49, %s51
    %p58 = scmp.eq.s32.totalorder %s20, 1
    %p59 = por %p57, %p58
    %p60 = scmp.ne.s32.totalorder %s51, %s52
    %p61 = scmp.eq.s32.totalorder %s20, 0
    %p62 = por %p60, %p61
    %p63 = scmp.ne.s32.totalorder %s51, %s52
    %p64 = scmp.eq.s32.totalorder %s21, 1
    %p65 = por %p63, %p64
    %p67 = scmp.ne.s32.totalorder %s52, %s66
    %p68 = scmp.eq.s32.totalorder %s21, 0
    %p69 = por %p67, %p68
    %s71 = sadd.s32 %s70, 1
    %p74 = scmp.eq.s32.totalorder %s15, 1
    %p75 = scmp.ne.s32.totalorder %s70, %s72
    %p76 = scmp.eq.s32.totalorder %s15, 0
    %p77 = por %p75, %p76
    %p78 = scmp.ne.s32.totalorder %s70, %s72
    %p79 = scmp.eq.s32.totalorder %s20, 1
    %p80 = por %p78, %p79
    %p81 = scmp.ne.s32.totalorder %s72, %s73
    %p82 = scmp.eq.s32.totalorder %s20, 0
    %p83 = por %p81, %p82
    %p84 = scmp.ne.s32.totalorder %s72, %s73
    %p85 = scmp.eq.s32.totalorder %s21, 1
    %p86 = por %p84, %p85
    %p88 = scmp.ne.s32.totalorder %s73, %s87
    %p89 = scmp.eq.s32.totalorder %s21, 0
    %p90 = por %p88, %p89
    %s92 = sadd.s32 %s91, 1
    %p95 = scmp.eq.s32.totalorder %s15, 1
    %p96 = scmp.ne.s32.totalorder %s91, %s93
    %p97 = scmp.eq.s32.totalorder %s15, 0
    %p98 = por %p96, %p97
    %p99 = scmp.ne.s32.totalorder %s91, %s93
    %p100 = scmp.eq.s32.totalorder %s20, 1
    %p101 = por %p99, %p100
    %p102 = scmp.ne.s32.totalorder %s93, %s94
    %p103 = scmp.eq.s32.totalorder %s20, 0
    %p104 = por %p102, %p103
    %p105 = scmp.ne.s32.totalorder %s93, %s94
    %p106 = scmp.eq.s32.totalorder %s21, 1
    %p107 = por %p105, %p106
    %p109 = scmp.ne.s32.totalorder %s94, %s108
    %p110 = scmp.eq.s32.totalorder %s21, 0
    %p111 = por %p109, %p110
    %s113 = sadd.s32 %s112, 1
    %p116 = scmp.eq.s32.totalorder %s15, 1
    %p117 = scmp.ne.s32.totalorder %s112, %s114
    %p118 = scmp.eq.s32.totalorder %s15, 0
    %p119 = por %p117, %p118
    %p120 = scmp.ne.s32.totalorder %s112, %s114
    %p121 = scmp.eq.s32.totalorder %s20, 1
    %p122 = por %p120, %p121
    %p123 = scmp.ne.s32.totalorder %s114, %s115
    %p124 = scmp.eq.s32.totalorder %s20, 0
    %p125 = por %p123, %p124
    %p126 = scmp.ne.s32.totalorder %s114, %s115
    %p127 = scmp.eq.s32.totalorder %s21, 1
    %p128 = por %p126, %p127
    %p130 = scmp.ne.s32.totalorder %s115, %s129
    %p131 = scmp.eq.s32.totalorder %s21, 0
    %p132 = por %p130, %p131
    %s134 = sadd.s32 %s133, 1
    %p137 = scmp.eq.s32.totalorder %s15, 1
    %p138 = scmp.ne.s32.totalorder %s133, %s135
    %p139 = scmp.eq.s32.totalorder %s15, 0
    %p140 = por %p138, %p139
    %p141 = scmp.ne.s32.totalorder %s133, %s135
    %p142 = scmp.eq.s32.totalorder %s20, 1
    %p143 = por %p141, %p142
    %p144 = scmp.ne.s32.totalorder %s135, %s136
    %p145 = scmp.eq.s32.totalorder %s20, 0
    %p146 = por %p144, %p145
    %p147 = scmp.ne.s32.totalorder %s135, %s136
    %p148 = scmp.eq.s32.totalorder %s21, 1
    %p149 = por %p147, %p148
    %p151 = scmp.ne.s32.totalorder %s136, %s150
    %p152 = scmp.eq.s32.totalorder %s21, 0
    %p153 = por %p151, %p152
    %s154 = ssub.s32 %s15, %s22
    %p155 = scmp.eq.s32.totalorder %s154, 0
    %s157 = sadd.s32 %s156, 1
    %s158 = scalar_select %p155, %s156, %s157
    %p161 = pneg %p155
    %p162 = scmp.eq.s32.totalorder %s15, 1
    %p163 = por %p161, %p162
    %p164 = scmp.ne.s32.totalorder %s156, %s159
    %p165 = scmp.eq.s32.totalorder %s15, 0
    %p166 = por %p164, %p165
    %p167 = scmp.ne.s32.totalorder %s156, %s159
    %p168 = scmp.eq.s32.totalorder %s20, 1
    %p169 = por %p167, %p168
    %p170 = scmp.ne.s32.totalorder %s159, %s160
    %p171 = scmp.eq.s32.totalorder %s20, 0
    %p172 = por %p170, %p171
    %p173 = scmp.ne.s32.totalorder %s159, %s160
    %p174 = scmp.eq.s32.totalorder %s21, 1
    %p175 = por %p173, %p174
    %p177 = scmp.ne.s32.totalorder %s160, %s176
    %p178 = scmp.eq.s32.totalorder %s21, 0
    %p179 = por %p177, %p178
    %s180 = ssub.s32 %s15, %s22
    %p181 = scmp.eq.s32.totalorder %s180, 0
    %s183 = sadd.s32 %s182, 1
    %s184 = scalar_select %p181, %s182, %s183
    %p187 = pneg %p181
    %p188 = scmp.eq.s32.totalorder %s15, 1
    %p189 = por %p187, %p188
    %p190 = scmp.ne.s32.totalorder %s182, %s185
    %p191 = scmp.eq.s32.totalorder %s15, 0
    %p192 = por %p190, %p191
    %p193 = scmp.ne.s32.totalorder %s182, %s185
    %p194 = scmp.eq.s32.totalorder %s20, 1
    %p195 = por %p193, %p194
    %p196 = scmp.ne.s32.totalorder %s185, %s186
    %p197 = scmp.eq.s32.totalorder %s20, 0
    %p198 = por %p196, %p197
    %p199 = scmp.ne.s32.totalorder %s185, %s186
    %p200 = scmp.eq.s32.totalorder %s21, 1
    %p201 = por %p199, %p200
    %p203 = scmp.ne.s32.totalorder %s186, %s202
    %p204 = scmp.eq.s32.totalorder %s21, 0
    %p205 = por %p203, %p204
    %s206 = ssub.s32 %s15, %s22
    %p207 = scmp.eq.s32.totalorder %s206, 0
    %s209 = sadd.s32 %s208, 1
    %s210 = scalar_select %p207, %s208, %s209
    %p213 = pneg %p207
    %p214 = scmp.eq.s32.totalorder %s15, 1
    %p215 = por %p213, %p214
    %p216 = scmp.ne.s32.totalorder %s208, %s211
    %p217 = scmp.eq.s32.totalorder %s15, 0
    %p218 = por %p216, %p217
    %p219 = scmp.ne.s32.totalorder %s208, %s211
    %p220 = scmp.eq.s32.totalorder %s20, 1
    %p221 = por %p219, %p220
    %p222 = scmp.ne.s32.totalorder %s211, %s212
    %p223 = scmp.eq.s32.totalorder %s20, 0
    %p224 = por %p222, %p223
    %p225 = scmp.ne.s32.totalorder %s211, %s212
    %p226 = scmp.eq.s32.totalorder %s21, 1
    %p227 = por %p225, %p226
    %p229 = scmp.ne.s32.totalorder %s212, %s228
    %p230 = scmp.eq.s32.totalorder %s21, 0
    %p231 = por %p229, %p230
    %p232 = scmp.le.s32.totalorder 1, %s15
    %p233 = scmp.lt.s32.totalorder %s15, 3
    %p234 = pnand %p232, %p233
    %p235 = pneg %p234
    // Predicated region
    $region9: #{residual_unit2_forward.2} parent=5 // pred_check
      _
    $region10: #{residual_unit2_forward.2} parent=5 // pred_check_branch
      %237 = sbr.rel (%p234) target = $region12
    $region11: #{residual_unit2_forward.2} parent=5 // pred_region
      %s238 = ssub.s32 %s15, 1
      // Predicated region
      $region13: #{residual_unit2_forward.2} parent=11 // pred_check
        %p239 = pneg %p62
      $region14: #{residual_unit2_forward.2} parent=11 // pred_check_branch
        %241 = sbr.rel (%p239) target = $region16
      $region15: #{residual_unit2_forward.2} parent=11 // pred_region
        _
      $region16: #{residual_unit2_forward.2} parent=11 // pred_fallthru
        _
      // Predicated region
      $region17: #{residual_unit2_forward.2} parent=11 // pred_check
        %p242 = pneg %p83
      $region18: #{residual_unit2_forward.2} parent=11 // pred_check_branch
        %244 = sbr.rel (%p242) target = $region20
      $region19: #{residual_unit2_forward.2} parent=11 // pred_region
        _
      $region20: #{residual_unit2_forward.2} parent=11 // pred_fallthru
        _
      // Predicated region
      $region21: #{residual_unit2_forward.2} parent=11 // pred_check
        %p245 = pneg %p104
      $region22: #{residual_unit2_forward.2} parent=11 // pred_check_branch
        %247 = sbr.rel (%p245) target = $region24
      $region23: #{residual_unit2_forward.2} parent=11 // pred_region
        _
      $region24: #{residual_unit2_forward.2} parent=11 // pred_fallthru
        _
      // Predicated region
      $region25: #{residual_unit2_forward.2} parent=11 // pred_check
        %p248 = pneg %p125
      $region26: #{residual_unit2_forward.2} parent=11 // pred_check_branch
        %250 = sbr.rel (%p248) target = $region28
      $region27: #{residual_unit2_forward.2} parent=11 // pred_region
        _
      $region28: #{residual_unit2_forward.2} parent=11 // pred_fallthru
        _
      // Predicated region
      $region29: #{residual_unit2_forward.2} parent=11 // pred_check
        %p251 = pneg %p146
      $region30: #{residual_unit2_forward.2} parent=11 // pred_check_branch
        %253 = sbr.rel (%p251) target = $region32
      $region31: #{residual_unit2_forward.2} parent=11 // pred_region
        _
      $region32: #{residual_unit2_forward.2} parent=11 // pred_fallthru
        _
    $region12: #{residual_unit2_forward.2} parent=5 // pred_fallthru
      _
    %p254 = scmp.lt.s32.totalorder %s15, 2
    // Predicated region
    $region33: #{residual_unit2_forward.2} parent=5 // pred_check
      %p255 = pneg %p254
    $region34: #{residual_unit2_forward.2} parent=5 // pred_check_branch
      %257 = sbr.rel (%p255) target = $region36
    $region35: #{residual_unit2_forward.2} parent=5 // pred_region
      // Predicated region
      $region37: #{residual_unit2_forward.2} parent=35 // pred_check
        %p258 = pneg %p35
      $region38: #{residual_unit2_forward.2} parent=35 // pred_check_branch
        %260 = sbr.rel (%p258) target = $region40
      $region39: #{residual_unit2_forward.2} parent=35 // pred_region
        %p261 = scmp.lt.s32.totalorder %s15, 1
        %s262 = scalar_select %p261, %s15, 1
        %s263 = smul.addr %s262, 2
        %s264 = smul.addr %s263, 4
        %s265 = scalar_lea.vmem %s0, %s264
      $region40: #{residual_unit2_forward.2} parent=35 // pred_fallthru
        _
    $region36: #{residual_unit2_forward.2} parent=5 // pred_fallthru
      _
    %p266 = scmp.le.s32.totalorder 1, %s15
    %p267 = scmp.lt.s32.totalorder %s15, 3
    %p268 = pnand %p266, %p267
    %p269 = pneg %p268
    // Predicated region
    $region41: #{residual_unit2_forward.2} parent=5 // pred_check
      _
    $region42: #{residual_unit2_forward.2} parent=5 // pred_check_branch
      %271 = sbr.rel (%p268) target = $region44
    $region43: #{residual_unit2_forward.2} parent=5 // pred_region
      %s272 = ssub.s32 %s15, 1
      %p273 = scmp.lt.s32.totalorder %s20, 1
      %s274 = scalar_select %p273, %s20, 1
      %s275 = smul.addr %s274, 2
      %s276 = smul.addr %s275, 4
      %s277 = scalar_lea.vmem %s0, %s276
      %p278 = pneg %p41
      %p279 = pneg %p38
      %p280 = pneg %p62
      %p281 = pneg %p59
      %p282 = pneg %p83
      %p283 = pneg %p80
      %p284 = pneg %p104
      %p285 = pneg %p101
      %p286 = pneg %p125
      %p287 = pneg %p122
      %p288 = pneg %p146
      %p289 = pneg %p143
      %p290 = pneg %p172
      %p291 = pneg %p169
      %p292 = scmp.lt.s32.totalorder %s20, 1
      %s293 = scalar_select %p292, %s20, 1
      %s294 = smul.addr %s293, 2
      %s295 = smul.addr %s294, 4
      %s296 = scalar_lea.vmem %s6, %s295
      %p297 = pneg %p198
      %p298 = pneg %p195
      %p299 = scmp.lt.s32.totalorder %s20, 1
      %s300 = scalar_select %p299, %s20, 1
      %s301 = smul.addr %s300, 8
      %s302 = scalar_lea.vmem %s7, %s301
      %p303 = pneg %p224
      %p304 = pneg %p221
      %p305 = scmp.lt.s32.totalorder %s20, 1
      %s306 = scalar_select %p305, %s20, 1
      %s307 = smul.addr %s306, 8
      %s308 = scalar_lea.vmem %s8, %s307
      %p309 = scmp.lt.s32.totalorder %s20, 1
      %s310 = scalar_select %p309, %s20, 1
      %s311 = smul.addr %s310, 2
      %s312 = smul.addr %s311, 4
      %s313 = scalar_lea.vmem %s0, %s312
      %p314 = scmp.lt.s32.totalorder %s20, 1
      %s315 = scalar_select %p314, %s20, 1
      %s316 = smul.addr %s315, 2
      %s317 = smul.addr %s316, 4
      %s318 = scalar_lea.vmem %s6, %s317
      %p319 = scmp.lt.s32.totalorder %s20, 1
      %s320 = scalar_select %p319, %s20, 1
      %s321 = smul.addr %s320, 8
      %s322 = scalar_lea.vmem %s7, %s321
      %p323 = scmp.lt.s32.totalorder %s20, 1
      %s324 = scalar_select %p323, %s20, 1
      %s325 = smul.addr %s324, 8
      %s326 = scalar_lea.vmem %s8, %s325
      %v328 = vld [vmem:[%s313] sm:$0xff]
      %v329 = vld [vmem:[%s2] sm:$0xf]
      %331 = vset.pattern.permute.xlu0 0
      %332 = vperm.xlu0 %331, %v329
      %v333 = vpop.permute.xlu0 %332
      %v335 = vunpack.c.l.s4 839922192
      %v336 = vunpack.c.0.s8 %v335
      %v337 = vlaneseq
      %v338 = vshrl.u32 %v337, 7
      %v339 = vsub.s32 %v336, %v338
      %v340 = vrot.slane %v333, %v339
      %v342 = vmul.f32 %v328, %v340
      %v343 = vld [vmem:[%s3] sm:$0xf]
      %345 = vset.pattern.permute.xlu0 0
      %346 = vperm.xlu0 %345, %v343
      %v347 = vpop.permute.xlu0 %346
      %v349 = vunpack.c.l.s4 839922192
      %v350 = vunpack.c.0.s8 %v349
      %v351 = vlaneseq
      %v352 = vshrl.u32 %v351, 7
      %v353 = vsub.s32 %v350, %v352
      %v354 = vrot.slane %v347, %v353
      %v356 = vadd.f32 %v342, %v354
      %vm357 = vcmp.ge.f32.partialorder %v356, 0.0
      %v358 = vmul.f32 %v356, 0.2
      %v359 = vsel %vm357, %v356, %v358
      %vm360 = vcmask 1042296
      %361 = vst.msk [vmem:[#allocation2] sm:$0x3] %vm360, 0
      %vm362 = vcmask 132096
      %363 = vst.msk [vmem:[#allocation2 + $0x6] sm:$0x3] %vm362, 0
      %v365 = vcombine.high %v359, %v359
      %v367 = vpack.c.bf16 %v359, %v359
      %v368 = vpack.c.bf16 %v365, %v365
      %v371 = vcombine.low %v367, %v368
      %v373 = vunpack.c.l.s4 1983009808
      %v374 = vunpack.c.0.s8 %v373
      %v375 = vlaneseq
      %v376 = vshrl.u32 %v375, 7
      %v377 = vsub.s32 %v374, %v376
      %v378 = vrot.slane %v371, %v377
      %380 = vst [vmem:[#allocation2 + $0x2] sm:$0xf] %v378
      %v381 = vld [vmem:[#allocation2] sm:$0xff]
      %v382 = vld [vmem:[%s1] sm:$0x3]
      %v385 = vunpack.c.l.s4 1966171168
      %v386 = vunpack.c.0.s8 %v385
      %v387 = vlaneseq
      %v388 = vshrl.u32 %v387, 7
      %v389 = vsub.s32 %v386, %v388
      %v390 = vrot.slane %v382, %v389
      %v391 = vcombine.high %v390, %v390
      %v393 = vunpack.c.l.s4 1966171168
      %v394 = vunpack.c.0.s8 %v393
      %v395 = vlaneseq
      %v396 = vshrl.u32 %v395, 7
      %v397 = vsub.s32 %v394, %v396
      %v398 = vrot.slane %v390, %v397
      %v400 = vunpack.c.l.s4 1966171168
      %v401 = vunpack.c.0.s8 %v400
      %v402 = vlaneseq
      %v403 = vshrl.u32 %v402, 7
      %v404 = vsub.s32 %v401, %v403
      %v405 = vrot.slane %v391, %v404
      %v407 = vpack.i.b16 %v398, %v398
      %v409 = vlaneseq
      %v410 = vshrl.u32 %v409, 7
      %v411 = vsub.s32 0, %v410
      %v412 = vrot.slane %v407, %v411
      %v414 = vpack.i.b16 %v405, %v405
      %v416 = vlaneseq
      %v417 = vshrl.u32 %v416, 7
      %v418 = vsub.s32 0, %v417
      %v419 = vrot.slane %v414, %v418
      %v422 = vcombine.low %v412, %v419
      %v424 = vunpack.c.l.s4 1983009808
      %v425 = vunpack.c.0.s8 %v424
      %v426 = vlaneseq
      %v427 = vshrl.u32 %v426, 7
      %v428 = vsub.s32 %v425, %v427
      %v429 = vrot.slane %v422, %v428
      %430 = vrot.lane.b32.xlu0 %v429, 111
      %v431 = vpop.permute.xlu0 %430
      %v432 = vrot.slane %v431, 6
      %vm433 = vcmask 908288
      %v434 = vsel %vm433, %v432, %v431
      %v436 = vmul.bf16 %v381, %v434
      %v438 = vcombine.high %v436, %v436
      %v440 = vunpack.c.l.s4 1983009808
      %v441 = vunpack.c.0.s8 %v440
      %v442 = vlaneseq
      %v443 = vshrl.u32 %v442, 7
      %v444 = vsub.s32 %v441, %v443
      %v445 = vrot.slane %v436, %v444
      %v447 = vunpack.c.l.s4 1983009808
      %v448 = vunpack.c.0.s8 %v447
      %v449 = vlaneseq
      %v450 = vshrl.u32 %v449, 7
      %v451 = vsub.s32 %v448, %v450
      %v452 = vrot.slane %v438, %v451
      %453 = vrot.lane.b32.xlu0 %v445, 17
      %v454 = vpop.permute.xlu0 %453
      %455 = vrot.lane.b32.xlu0 %v452, 17
      %v456 = vpop.permute.xlu0 %455
      %v457 = vrot.slane %v454, 4
      %v458 = vrot.slane %v456, 4
      %vm459 = vcmask 1043456
      %v460 = vsel %vm459, %v457, %v458
      %vm461 = vcmask 138240
      %v462 = vsel %vm461, %v454, %v460
      %464 = vst [vmem:[#allocation3] sm:$0x33] %v462
      %v466 = vcombine.low %v381, %v381
      %v468 = vunpack.c.l.s4 1983009808
      %v469 = vunpack.c.0.s8 %v468
      %v470 = vlaneseq
      %v471 = vshrl.u32 %v470, 7
      %v472 = vsub.s32 %v469, %v471
      %v473 = vrot.slane %v466, %v472
      %v475 = vunpack.c.l.s4 1983009808
      %v476 = vunpack.c.0.s8 %v475
      %v477 = vlaneseq
      %v478 = vshrl.u32 %v477, 7
      %v479 = vsub.s32 %v476, %v478
      %v480 = vrot.slane %v381, %v479
      %481 = vrot.lane.b32.xlu0 %v473, 16
      %v482 = vpop.permute.xlu0 %481
      %483 = vrot.lane.b32.xlu0 %v480, 16
      %v484 = vpop.permute.xlu0 %483
      %v485 = vrot.slane %v482, 4
      %v486 = vrot.slane %v484, 4
      %v487 = vsel %vm459, %v485, %v486
      %vm488 = vcmask 130048
      %v489 = vsel %vm488, %v482, %v487
      %491 = vst [vmem:[#allocation3] sm:$0xcc] %v489
      %v492 = vshrl.u32 %v398, 16
      %v493 = vpack.i.b16 %v492, %v492
      %v495 = vlaneseq
      %v496 = vshrl.u32 %v495, 7
      %v497 = vsub.s32 0, %v496
      %v498 = vrot.slane %v493, %v497
      %v499 = vshrl.u32 %v405, 16
      %v500 = vpack.i.b16 %v499, %v499
      %v502 = vlaneseq
      %v503 = vshrl.u32 %v502, 7
      %v504 = vsub.s32 0, %v503
      %v505 = vrot.slane %v500, %v504
      %v508 = vcombine.low %v498, %v505
      %v510 = vunpack.c.l.s4 1983009808
      %v511 = vunpack.c.0.s8 %v510
      %v512 = vlaneseq
      %v513 = vshrl.u32 %v512, 7
      %v514 = vsub.s32 %v511, %v513
      %v515 = vrot.slane %v508, %v514
      %516 = vrot.lane.b32.xlu0 %v515, 113
      %v517 = vpop.permute.xlu0 %516
      %v518 = vrot.slane %v517, 6
      %vm519 = vcmask 924672
      %v520 = vsel %vm519, %v518, %v517
      %v522 = vmul.bf16 %v381, %v520
      %v524 = vcombine.high %v522, %v522
      %v526 = vunpack.c.l.s4 1983009808
      %v527 = vunpack.c.0.s8 %v526
      %v528 = vlaneseq
      %v529 = vshrl.u32 %v528, 7
      %v530 = vsub.s32 %v527, %v529
      %v531 = vrot.slane %v522, %v530
      %v533 = vunpack.c.l.s4 1983009808
      %v534 = vunpack.c.0.s8 %v533
      %v535 = vlaneseq
      %v536 = vshrl.u32 %v535, 7
      %v537 = vsub.s32 %v534, %v536
      %v538 = vrot.slane %v524, %v537
      %539 = vrot.lane.b32.xlu0 %v531, 15
      %v540 = vpop.permute.xlu0 %539
      %541 = vrot.lane.b32.xlu0 %v538, 15
      %v542 = vpop.permute.xlu0 %541
      %v543 = vrot.slane %v540, 4
      %v544 = vrot.slane %v542, 4
      %v545 = vsel %vm459, %v543, %v544
      %vm546 = vcmask 121856
      %v547 = vsel %vm546, %v540, %v545
      %549 = vst [vmem:[#allocation3 + $0x8] sm:$0x33] %v547
      %550 = vrot.lane.b32.xlu0 %v429, 127
      %v551 = vpop.permute.xlu0 %550
      %v552 = vrot.slane %v551, 6
      %vm553 = vcmask 1039360
      %v554 = vsel %vm553, %v552, %v551
      %v556 = vmul.bf16 %v381, %v554
      %v558 = vcombine.low %v556, %v556
      %v560 = vunpack.c.l.s4 1983009808
      %v561 = vunpack.c.0.s8 %v560
      %v562 = vlaneseq
      %v563 = vshrl.u32 %v562, 7
      %v564 = vsub.s32 %v561, %v563
      %v565 = vrot.slane %v558, %v564
      %v567 = vunpack.c.l.s4 1983009808
      %v568 = vunpack.c.0.s8 %v567
      %v569 = vlaneseq
      %v570 = vshrl.u32 %v569, 7
      %v571 = vsub.s32 %v568, %v570
      %v572 = vrot.slane %v556, %v571
      %573 = vrot.lane.b32.xlu0 %v565, 1
      %v574 = vpop.permute.xlu0 %573
      %575 = vrot.lane.b32.xlu0 %v572, 1
      %v576 = vpop.permute.xlu0 %575
      %v577 = vrot.slane %v574, 4
      %v578 = vrot.slane %v576, 4
      %v579 = vsel %vm459, %v577, %v578
      %vm580 = vcmask 7168
      %v581 = vsel %vm580, %v574, %v579
      %583 = vst [vmem:[#allocation3 + $0x8] sm:$0xcc] %v581
      %v584 = vcombine.high %v381, %v381
      %v586 = vunpack.c.l.s4 1983009808
      %v587 = vunpack.c.0.s8 %v586
      %v588 = vlaneseq
      %v589 = vshrl.u32 %v588, 7
      %v590 = vsub.s32 %v587, %v589
      %v591 = vrot.slane %v584, %v590
      %v592 = vrot.slane %v480, 4
      %v593 = vrot.slane %v591, 4
      %v594 = vsel %vm459, %v592, %v593
      %596 = vst [vmem:[#allocation3 + $0x10] sm:$0x33] %v594
      %597 = vrot.lane.b32.xlu0 %v381, 127
      %v598 = vpop.permute.xlu0 %597
      %v599 = vrot.slane %v598, 2
      %v600 = vrot.slane %v598, 4
      %v601 = vsel %vm553, %v599, %v600
      %v604 = vmul.bf16 %v601, %v515
      %v606 = vcombine.low %v604, %v604
      %v608 = vunpack.c.l.s4 1983009808
      %v609 = vunpack.c.0.s8 %v608
      %v610 = vlaneseq
      %v611 = vshrl.u32 %v610, 7
      %v612 = vsub.s32 %v609, %v611
      %v613 = vrot.slane %v606, %v612
      %615 = vst [vmem:[#allocation3 + $0x10] sm:$0xcc] %v613
      %616 = vrot.lane.b32.xlu0 %v381, 113
      %v617 = vpop.permute.xlu0 %616
      %v618 = vrot.slane %v617, 2
      %v619 = vrot.slane %v617, 4
      %v620 = vsel %vm519, %v618, %v619
      %v623 = vmul.bf16 %v620, %v429
      %v626 = vunpack.c.l.s4 1983009808
      %v627 = vunpack.c.0.s8 %v626
      %v628 = vlaneseq
      %v629 = vshrl.u32 %v628, 7
      %v630 = vsub.s32 %v627, %v629
      %v631 = vrot.slane %v623, %v630
      %633 = vst [vmem:[#allocation3 + $0x18] sm:$0x33] %v631
      %634 = vrot.lane.b32.xlu0 %v473, 112
      %v635 = vpop.permute.xlu0 %634
      %636 = vrot.lane.b32.xlu0 %v480, 112
      %v637 = vpop.permute.xlu0 %636
      %v638 = vrot.slane %v635, 4
      %v639 = vrot.slane %v637, 4
      %v640 = vsel %vm459, %v638, %v639
      %vm641 = vcmask 916480
      %v642 = vsel %vm641, %v640, %v637
      %644 = vst [vmem:[#allocation3 + $0x18] sm:$0xcc] %v642
      %645 = vrot.lane.b32.xlu0 %v381, 111
      %v646 = vpop.permute.xlu0 %645
      %v647 = vrot.slane %v646, 2
      %v648 = vrot.slane %v646, 4
      %v649 = vsel %vm433, %v647, %v648
      %v651 = vmul.bf16 %v649, %v515
      %v654 = vunpack.c.l.s4 1983009808
      %v655 = vunpack.c.0.s8 %v654
      %v656 = vlaneseq
      %v657 = vshrl.u32 %v656, 7
      %v658 = vsub.s32 %v655, %v657
      %v659 = vrot.slane %v651, %v658
      %661 = vst [vmem:[#allocation3 + $0x20] sm:$0x33] %v659
      %v662 = vld [vmem:[%s4] sm:$0xf]
      %v663 = vld [vmem:[#allocation3] sm:$0xff]
      %v664 = vld [vmem:[#allocation3 + $0x8] sm:$0xff]
      %v665 = vld [vmem:[#allocation3 + $0x10] sm:$0xff]
      %v666 = vld [vmem:[#allocation3 + $0x18] sm:$0xff]
      %v667 = vld [vmem:[#allocation3 + $0x20] sm:$0x33]
      %v668 = vld [vmem:[%s5] sm:$0xff]
      %670 = vset.pattern.permute.xlu0 0
      %671 = vperm.xlu0 %670, %v668
      %v672 = vpop.permute.xlu0 %671
      %v679 = vunpack.c.l.b16 %v663
      %v680 = vunpack.c.h.b16 %v663
      %v681 = vunpack.c.l.b16 %v664
      %v682 = vunpack.c.h.b16 %v664
      %v683 = vunpack.c.l.b16 %v665
      %v684 = vunpack.c.h.b16 %v665
      %v685 = vunpack.c.l.b16 %v666
      %v686 = vunpack.c.h.b16 %v666
      %v687 = vunpack.c.l.b16 %v667
      %v688 = vunpack.c.h.b16 %v667
      %v689 = vpack.c.b16 %v681, %v679
      %v690 = vpack.c.b16 %v682, %v680
      %v691 = vpack.c.b16 %v685, %v683
      %v692 = vpack.c.b16 %v686, %v684
      %v693 = vpack.c.b16 %v687, %v687
      %v694 = vpack.c.b16 %v688, %v688
      %vm699 = vcmask 293888
      %v701 = vsel %vm699, %v662, 0
      %vm703 = vcmask 1041408
      %v705 = vsel %vm703, %v693, 0
      %v708 = vsel %vm703, %v694, 0
      %710 = vmatprep.subr.bf16.mxu0 %v690
      %711 = vmatpush1.bf16.msra.mxu0 %v689
      %712 = vmatprep.subr.bf16.mxu0 %v692
      %713 = vmatpush1.bf16.msra.mxu0 %v691
      %714 = vmatprep.subr.bf16.mxu0 %v708
      %715 = vmatpush1.bf16.msra.mxu0 %v705
      %716 = vmatprep.subr.bf16.mxu0 0
      %717 = vmatpush1.bf16.msra.mxu0 0
      %718 = vmatprep.subr.bf16.mxu0 0
      %719 = vmatpush1.bf16.msra.mxu0 0
      %720 = vmatprep.subr.bf16.mxu0 0
      %721 = vmatpush1.bf16.msra.mxu0 0
      %722 = vmatprep.subr.bf16.mxu0 0
      %723 = vmatpush1.bf16.msra.mxu0 0
      %724 = vmatprep.subr.bf16.mxu0 0
      %725 = vmatpush1.bf16.msra.mxu0 0
      %726 = vmatprep.subr.bf16.mxu0 0
      %727 = vmatpush1.bf16.msra.mxu0 0
      %728 = vmatprep.subr.bf16.mxu0 0
      %729 = vmatpush1.bf16.msra.mxu0 0
      %730 = vmatprep.subr.bf16.mxu0 0
      %731 = vmatpush1.bf16.msra.mxu0 0
      %732 = vmatprep.subr.bf16.mxu0 0
      %733 = vmatpush1.bf16.msra.mxu0 0
      %734 = vmatprep.subr.bf16.mxu0 0
      %735 = vmatpush1.bf16.msra.mxu0 0
      %736 = vmatprep.subr.bf16.mxu0 0
      %737 = vmatpush1.bf16.msra.mxu0 0
      %738 = vmatprep.subr.bf16.mxu0 0
      %739 = vmatpush1.bf16.msra.mxu0 0
      %740 = vmatprep.subr.bf16.mxu0 0
      %741 = vmatpush1.bf16.msra.mxu0 0
      %742 = vmatprep.mubr.bf16.mxu0 0
      %743 = vmatmul.mubr.bf16.gmra.mrb[0].mxu0 %v701
      %v744 = vpop.f32.mrb[0].mxu0
      %v745 = vadd.f32 %v672, %v744
      %v746 = vpop.f32.mrb[0].mxu0
      %v747 = vadd.f32 %v672, %v746
      %v748 = vpop.f32.mrb[0].mxu0
      %v749 = vpop.f32.mrb[0].mxu0
      %750 = vdwg.mxu0
      %v751 = vpack.c.bf16 %v745, %v745
      %v752 = vpack.c.bf16 %v747, %v747
      %v755 = vunpack.c.l.b16 %v751
      %v756 = vunpack.c.l.b16 %v752
      %v757 = vpack.c.b16 %v756, %v755
      %759 = vst [vmem:[%s318] sm:$0xff] %v757
      %v760 = vadd.f32 %v745, %v747
      %761 = vadd.xlane.f32.xlu0 %v760
      %v762 = vpop.xlane.xlu0 %761
      %vm763 = vcmask 7168
      %764 = vst.msk [vmem:[%s322] sm:$0xff] %vm763, %v762
      %v765 = vmul.f32 %v745, %v745
      %v766 = vmul.f32 %v747, %v747
      %v767 = vadd.f32 %v765, %v766
      %768 = vadd.xlane.f32.xlu0 %v767
      %v769 = vpop.xlane.xlu0 %768
      %770 = vst.msk [vmem:[%s326] sm:$0xff] %vm763, %v769
      %p771 = scmp.lt.s32.totalorder %s20, 1
      %s772 = scalar_select %p771, %s20, 1
      %s773 = smul.addr %s772, 2
      %s774 = smul.addr %s773, 4
      %s775 = scalar_lea.vmem %s6, %s774
      %p776 = scmp.lt.s32.totalorder %s20, 1
      %s777 = scalar_select %p776, %s20, 1
      %s778 = smul.addr %s777, 8
      %s779 = scalar_lea.vmem %s7, %s778
      %p780 = scmp.lt.s32.totalorder %s20, 1
      %s781 = scalar_select %p780, %s20, 1
      %s782 = smul.addr %s781, 8
      %s783 = scalar_lea.vmem %s8, %s782
      // Predicated region
      $region45: #{residual_unit2_forward.2} parent=43 // pred_check
        %p784 = pneg %p169
      $region46: #{residual_unit2_forward.2} parent=43 // pred_check_branch
        %786 = sbr.rel (%p784) target = $region48
      $region47: #{residual_unit2_forward.2} parent=43 // pred_region
        _
      $region48: #{residual_unit2_forward.2} parent=43 // pred_fallthru
        _
      // Predicated region
      $region49: #{residual_unit2_forward.2} parent=43 // pred_check
        %p787 = pneg %p195
      $region50: #{residual_unit2_forward.2} parent=43 // pred_check_branch
        %789 = sbr.rel (%p787) target = $region52
      $region51: #{residual_unit2_forward.2} parent=43 // pred_region
        _
      $region52: #{residual_unit2_forward.2} parent=43 // pred_fallthru
        _
      // Predicated region
      $region53: #{residual_unit2_forward.2} parent=43 // pred_check
        %p790 = pneg %p221
      $region54: #{residual_unit2_forward.2} parent=43 // pred_check_branch
        %792 = sbr.rel (%p790) target = $region56
      $region55: #{residual_unit2_forward.2} parent=43 // pred_region
        _
      $region56: #{residual_unit2_forward.2} parent=43 // pred_fallthru
        _
    $region44: #{residual_unit2_forward.2} parent=5 // pred_fallthru
      _
    %p793 = scmp.le.s32.totalorder 2, %s15
    // Predicated region
    $region57: #{residual_unit2_forward.2} parent=5 // pred_check
      %p794 = pneg %p793
    $region58: #{residual_unit2_forward.2} parent=5 // pred_check_branch
      %796 = sbr.rel (%p794) target = $region60
    $region59: #{residual_unit2_forward.2} parent=5 // pred_region
      %s797 = ssub.s32 %s15, 2
      // Predicated region
      $region61: #{residual_unit2_forward.2} parent=59 // pred_check
        %p798 = pneg %p175
      $region62: #{residual_unit2_forward.2} parent=59 // pred_check_branch
        %800 = sbr.rel (%p798) target = $region64
      $region63: #{residual_unit2_forward.2} parent=59 // pred_region
        %p801 = scmp.lt.s32.totalorder %s21, 1
        %s802 = scalar_select %p801, %s21, 1
        %s803 = smul.addr %s802, 2
        %s804 = smul.addr %s803, 4
        %s805 = scalar_lea.vmem %s6, %s804
      $region64: #{residual_unit2_forward.2} parent=59 // pred_fallthru
        _
      // Predicated region
      $region65: #{residual_unit2_forward.2} parent=59 // pred_check
        %p806 = pneg %p201
      $region66: #{residual_unit2_forward.2} parent=59 // pred_check_branch
        %808 = sbr.rel (%p806) target = $region68
      $region67: #{residual_unit2_forward.2} parent=59 // pred_region
        %p809 = scmp.lt.s32.totalorder %s21, 1
        %s810 = scalar_select %p809, %s21, 1
        %s811 = smul.addr %s810, 8
        %s812 = scalar_lea.vmem %s7, %s811
      $region68: #{residual_unit2_forward.2} parent=59 // pred_fallthru
        _
      // Predicated region
      $region69: #{residual_unit2_forward.2} parent=59 // pred_check
        %p813 = pneg %p227
      $region70: #{residual_unit2_forward.2} parent=59 // pred_check_branch
        %815 = sbr.rel (%p813) target = $region72
      $region71: #{residual_unit2_forward.2} parent=59 // pred_region
        %p816 = scmp.lt.s32.totalorder %s21, 1
        %s817 = scalar_select %p816, %s21, 1
        %s818 = smul.addr %s817, 8
        %s819 = scalar_lea.vmem %s8, %s818
      $region72: #{residual_unit2_forward.2} parent=59 // pred_fallthru
        _
    $region60: #{residual_unit2_forward.2} parent=5 // pred_fallthru
      _
  $region6: #{residual_unit2_forward.2} parent=0 // loop_footer
    %s19 = sadd.s32 1, %s15
  $region7: #{residual_unit2_forward.2} parent=0 // loop_footer_branch
    %14 = sbr.rel target = $region3
  $region8: #{residual_unit2_forward.2} parent=0 // loop_exit
    _

// kernel: residual_unit2_forward.3
$region0: #{residual_unit2_forward.3}
  #allocation0 [shape = 'u32[]', space=smem, size = 0x4, offset = 0x4, fixed_abs, tag = 'smem constant byte address 0x4 - core index']
  #allocation1 [shape = 'u32[144,128]{1,0:T(1,128)}', space=vmem, size = 0x12000, scoped, tag = 'internal scratch']
  #allocation2 [shape = 'bf16[8,512]{1,0:T(8,128)(2,1)}', space=vmem, size = 0x2000, scoped, tag = 'scratch operand']
  #allocation3 [shape = 'bf16[72,256]{1,0:T(8,128)(2,1)}', space=vmem, size = 0x9000, scoped, tag = 'scratch operand']
  %s0 = inlined_call_operand.vmem [shape: bf16[2,8,256], index: 0, kind: input, shape index: {}]
  %s1 = inlined_call_operand.vmem [shape: f32[2,4,256], index: 1, kind: input, shape index: {}]
  %s2 = inlined_call_operand.vmem [shape: bf16[2,256], index: 2, kind: input, shape index: {}]
  %s3 = inlined_call_operand.vmem [shape: f32[8,1], index: 3, kind: input, shape index: {}]
  %s4 = inlined_call_operand.vmem [shape: f32[8,1], index: 4, kind: input, shape index: {}]
  %s5 = inlined_call_operand.vmem [shape: bf16[8,72], index: 5, kind: input, shape index: {}]
  %s6 = inlined_call_operand.vmem [shape: bf16[8,4], index: 6, kind: input, shape index: {}]
  %s7 = inlined_call_operand.vmem [shape: f32[8,1], index: 7, kind: input, shape index: {}]
  %s8 = inlined_call_operand.vmem [shape: f32[2,8,256], index: 8, kind: output, shape index: {}]
  %s9 = sld [smem:[#allocation0]]
  $region65: #{residual_unit2_forward.3} parent=0
    _
  %s11 = ssub.s32 1, %s9
  %s12 = scalar_select 0, %s11, %s9
  loop: start=0, step=1, limit=4
  $region2: #{residual_unit2_forward.3} parent=0 // loop_pre_header
    _
  $region3: #{residual_unit2_forward.3} parent=0 // loop_header
    %s14 = sphi 0, %s18
    %p15 = scmp.ge.s32.totalorder %s14, 4
    %s24 = sphi 0, %s26
    %s27 = sphi 0, %s24
    %s28 = sphi 0, %s27
    %s44 = sphi 0, %s28
    %s50 = sphi 0, %s52
    %s53 = sphi 0, %s50
    %s54 = sphi 0, %s53
    %s70 = sphi 0, %s54
    %s74 = sphi 0, %s74
    %s76 = sphi 0, %s74
    %s77 = sphi 0, %s76
    %s91 = sphi 0, %s77
    %s95 = sphi 0, %s95
    %s97 = sphi 0, %s95
    %s98 = sphi 0, %s97
    %s112 = sphi 0, %s98
    %s116 = sphi 0, %s116
    %s118 = sphi 0, %s116
    %s119 = sphi 0, %s118
    %s133 = sphi 0, %s119
    %s137 = sphi 0, %s137
    %s139 = sphi 0, %s137
    %s140 = sphi 0, %s139
    %s154 = sphi 0, %s140
    %s158 = sphi 0, %s158
    %s160 = sphi 0, %s158
    %s161 = sphi 0, %s160
    %s175 = sphi 0, %s161
    %s179 = sphi 0, %s179
    %s181 = sphi 0, %s179
    %s182 = sphi 0, %s181
    %s196 = sphi 0, %s182
    %s202 = sphi 0, %s204
    %s205 = sphi 0, %s202
    %s206 = sphi 0, %s205
    %s222 = sphi 0, %s206
  $region4: #{residual_unit2_forward.3} parent=0 // loop_header_branch
    %17 = sbr.rel (%p15) target = $region8
  $region5: #{residual_unit2_forward.3} parent=0 // loop_body
    %s19 = ssub.s32 %s14, 1
    %s20 = ssub.s32 %s14, 2
    %s21 = sadd.s32 %s14, 1
    %s22 = ssub.s32 %s14, %s21
    %p23 = scmp.eq.s32.totalorder %s22, 0
    %s25 = sadd.s32 %s24, 1
    %s26 = scalar_select %p23, %s24, %s25
    %p29 = pneg %p23
    %p30 = scmp.eq.s32.totalorder %s14, 1
    %p31 = por %p29, %p30
    %p32 = scmp.ne.s32.totalorder %s24, %s27
    %p33 = scmp.eq.s32.totalorder %s14, 0
    %p34 = por %p32, %p33
    %p35 = scmp.ne.s32.totalorder %s24, %s27
    %p36 = scmp.eq.s32.totalorder %s19, 1
    %p37 = por %p35, %p36
    %p38 = scmp.ne.s32.totalorder %s27, %s28
    %p39 = scmp.eq.s32.totalorder %s19, 0
    %p40 = por %p38, %p39
    %p41 = scmp.ne.s32.totalorder %s27, %s28
    %p42 = scmp.eq.s32.totalorder %s20, 1
    %p43 = por %p41, %p42
    %p45 = scmp.ne.s32.totalorder %s28, %s44
    %p46 = scmp.eq.s32.totalorder %s20, 0
    %p47 = por %p45, %p46
    %s48 = ssub.s32 %s14, %s21
    %p49 = scmp.eq.s32.totalorder %s48, 0
    %s51 = sadd.s32 %s50, 1
    %s52 = scalar_select %p49, %s50, %s51
    %p55 = pneg %p49
    %p56 = scmp.eq.s32.totalorder %s14, 1
    %p57 = por %p55, %p56
    %p58 = scmp.ne.s32.totalorder %s50, %s53
    %p59 = scmp.eq.s32.totalorder %s14, 0
    %p60 = por %p58, %p59
    %p61 = scmp.ne.s32.totalorder %s50, %s53
    %p62 = scmp.eq.s32.totalorder %s19, 1
    %p63 = por %p61, %p62
    %p64 = scmp.ne.s32.totalorder %s53, %s54
    %p65 = scmp.eq.s32.totalorder %s19, 0
    %p66 = por %p64, %p65
    %p67 = scmp.ne.s32.totalorder %s53, %s54
    %p68 = scmp.eq.s32.totalorder %s20, 1
    %p69 = por %p67, %p68
    %p71 = scmp.ne.s32.totalorder %s54, %s70
    %p72 = scmp.eq.s32.totalorder %s20, 0
    %p73 = por %p71, %p72
    %s75 = sadd.s32 %s74, 1
    %p78 = scmp.eq.s32.totalorder %s14, 1
    %p79 = scmp.ne.s32.totalorder %s74, %s76
    %p80 = scmp.eq.s32.totalorder %s14, 0
    %p81 = por %p79, %p80
    %p82 = scmp.ne.s32.totalorder %s74, %s76
    %p83 = scmp.eq.s32.totalorder %s19, 1
    %p84 = por %p82, %p83
    %p85 = scmp.ne.s32.totalorder %s76, %s77
    %p86 = scmp.eq.s32.totalorder %s19, 0
    %p87 = por %p85, %p86
    %p88 = scmp.ne.s32.totalorder %s76, %s77
    %p89 = scmp.eq.s32.totalorder %s20, 1
    %p90 = por %p88, %p89
    %p92 = scmp.ne.s32.totalorder %s77, %s91
    %p93 = scmp.eq.s32.totalorder %s20, 0
    %p94 = por %p92, %p93
    %s96 = sadd.s32 %s95, 1
    %p99 = scmp.eq.s32.totalorder %s14, 1
    %p100 = scmp.ne.s32.totalorder %s95, %s97
    %p101 = scmp.eq.s32.totalorder %s14, 0
    %p102 = por %p100, %p101
    %p103 = scmp.ne.s32.totalorder %s95, %s97
    %p104 = scmp.eq.s32.totalorder %s19, 1
    %p105 = por %p103, %p104
    %p106 = scmp.ne.s32.totalorder %s97, %s98
    %p107 = scmp.eq.s32.totalorder %s19, 0
    %p108 = por %p106, %p107
    %p109 = scmp.ne.s32.totalorder %s97, %s98
    %p110 = scmp.eq.s32.totalorder %s20, 1
    %p111 = por %p109, %p110
    %p113 = scmp.ne.s32.totalorder %s98, %s112
    %p114 = scmp.eq.s32.totalorder %s20, 0
    %p115 = por %p113, %p114
    %s117 = sadd.s32 %s116, 1
    %p120 = scmp.eq.s32.totalorder %s14, 1
    %p121 = scmp.ne.s32.totalorder %s116, %s118
    %p122 = scmp.eq.s32.totalorder %s14, 0
    %p123 = por %p121, %p122
    %p124 = scmp.ne.s32.totalorder %s116, %s118
    %p125 = scmp.eq.s32.totalorder %s19, 1
    %p126 = por %p124, %p125
    %p127 = scmp.ne.s32.totalorder %s118, %s119
    %p128 = scmp.eq.s32.totalorder %s19, 0
    %p129 = por %p127, %p128
    %p130 = scmp.ne.s32.totalorder %s118, %s119
    %p131 = scmp.eq.s32.totalorder %s20, 1
    %p132 = por %p130, %p131
    %p134 = scmp.ne.s32.totalorder %s119, %s133
    %p135 = scmp.eq.s32.totalorder %s20, 0
    %p136 = por %p134, %p135
    %s138 = sadd.s32 %s137, 1
    %p141 = scmp.eq.s32.totalorder %s14, 1
    %p142 = scmp.ne.s32.totalorder %s137, %s139
    %p143 = scmp.eq.s32.totalorder %s14, 0
    %p144 = por %p142, %p143
    %p145 = scmp.ne.s32.totalorder %s137, %s139
    %p146 = scmp.eq.s32.totalorder %s19, 1
    %p147 = por %p145, %p146
    %p148 = scmp.ne.s32.totalorder %s139, %s140
    %p149 = scmp.eq.s32.totalorder %s19, 0
    %p150 = por %p148, %p149
    %p151 = scmp.ne.s32.totalorder %s139, %s140
    %p152 = scmp.eq.s32.totalorder %s20, 1
    %p153 = por %p151, %p152
    %p155 = scmp.ne.s32.totalorder %s140, %s154
    %p156 = scmp.eq.s32.totalorder %s20, 0
    %p157 = por %p155, %p156
    %s159 = sadd.s32 %s158, 1
    %p162 = scmp.eq.s32.totalorder %s14, 1
    %p163 = scmp.ne.s32.totalorder %s158, %s160
    %p164 = scmp.eq.s32.totalorder %s14, 0
    %p165 = por %p163, %p164
    %p166 = scmp.ne.s32.totalorder %s158, %s160
    %p167 = scmp.eq.s32.totalorder %s19, 1
    %p168 = por %p166, %p167
    %p169 = scmp.ne.s32.totalorder %s160, %s161
    %p170 = scmp.eq.s32.totalorder %s19, 0
    %p171 = por %p169, %p170
    %p172 = scmp.ne.s32.totalorder %s160, %s161
    %p173 = scmp.eq.s32.totalorder %s20, 1
    %p174 = por %p172, %p173
    %p176 = scmp.ne.s32.totalorder %s161, %s175
    %p177 = scmp.eq.s32.totalorder %s20, 0
    %p178 = por %p176, %p177
    %s180 = sadd.s32 %s179, 1
    %p183 = scmp.eq.s32.totalorder %s14, 1
    %p184 = scmp.ne.s32.totalorder %s179, %s181
    %p185 = scmp.eq.s32.totalorder %s14, 0
    %p186 = por %p184, %p185
    %p187 = scmp.ne.s32.totalorder %s179, %s181
    %p188 = scmp.eq.s32.totalorder %s19, 1
    %p189 = por %p187, %p188
    %p190 = scmp.ne.s32.totalorder %s181, %s182
    %p191 = scmp.eq.s32.totalorder %s19, 0
    %p192 = por %p190, %p191
    %p193 = scmp.ne.s32.totalorder %s181, %s182
    %p194 = scmp.eq.s32.totalorder %s20, 1
    %p195 = por %p193, %p194
    %p197 = scmp.ne.s32.totalorder %s182, %s196
    %p198 = scmp.eq.s32.totalorder %s20, 0
    %p199 = por %p197, %p198
    %s200 = ssub.s32 %s14, %s21
    %p201 = scmp.eq.s32.totalorder %s200, 0
    %s203 = sadd.s32 %s202, 1
    %s204 = scalar_select %p201, %s202, %s203
    %p207 = pneg %p201
    %p208 = scmp.eq.s32.totalorder %s14, 1
    %p209 = por %p207, %p208
    %p210 = scmp.ne.s32.totalorder %s202, %s205
    %p211 = scmp.eq.s32.totalorder %s14, 0
    %p212 = por %p210, %p211
    %p213 = scmp.ne.s32.totalorder %s202, %s205
    %p214 = scmp.eq.s32.totalorder %s19, 1
    %p215 = por %p213, %p214
    %p216 = scmp.ne.s32.totalorder %s205, %s206
    %p217 = scmp.eq.s32.totalorder %s19, 0
    %p218 = por %p216, %p217
    %p219 = scmp.ne.s32.totalorder %s205, %s206
    %p220 = scmp.eq.s32.totalorder %s20, 1
    %p221 = por %p219, %p220
    %p223 = scmp.ne.s32.totalorder %s206, %s222
    %p224 = scmp.eq.s32.totalorder %s20, 0
    %p225 = por %p223, %p224
    %p226 = scmp.le.s32.totalorder 1, %s14
    %p227 = scmp.lt.s32.totalorder %s14, 3
    %p228 = pnand %p226, %p227
    %p229 = pneg %p228
    // Predicated region
    $region9: #{residual_unit2_forward.3} parent=5 // pred_check
      _
    $region10: #{residual_unit2_forward.3} parent=5 // pred_check_branch
      %231 = sbr.rel (%p228) target = $region12
    $region11: #{residual_unit2_forward.3} parent=5 // pred_region
      %s232 = ssub.s32 %s14, 1
      // Predicated region
      $region13: #{residual_unit2_forward.3} parent=11 // pred_check
        %p233 = pneg %p87
      $region14: #{residual_unit2_forward.3} parent=11 // pred_check_branch
        %235 = sbr.rel (%p233) target = $region16
      $region15: #{residual_unit2_forward.3} parent=11 // pred_region
        _
      $region16: #{residual_unit2_forward.3} parent=11 // pred_fallthru
        _
      // Predicated region
      $region17: #{residual_unit2_forward.3} parent=11 // pred_check
        %p236 = pneg %p108
      $region18: #{residual_unit2_forward.3} parent=11 // pred_check_branch
        %238 = sbr.rel (%p236) target = $region20
      $region19: #{residual_unit2_forward.3} parent=11 // pred_region
        _
      $region20: #{residual_unit2_forward.3} parent=11 // pred_fallthru
        _
      // Predicated region
      $region21: #{residual_unit2_forward.3} parent=11 // pred_check
        %p239 = pneg %p129
      $region22: #{residual_unit2_forward.3} parent=11 // pred_check_branch
        %241 = sbr.rel (%p239) target = $region24
      $region23: #{residual_unit2_forward.3} parent=11 // pred_region
        _
      $region24: #{residual_unit2_forward.3} parent=11 // pred_fallthru
        _
      // Predicated region
      $region25: #{residual_unit2_forward.3} parent=11 // pred_check
        %p242 = pneg %p150
      $region26: #{residual_unit2_forward.3} parent=11 // pred_check_branch
        %244 = sbr.rel (%p242) target = $region28
      $region27: #{residual_unit2_forward.3} parent=11 // pred_region
        _
      $region28: #{residual_unit2_forward.3} parent=11 // pred_fallthru
        _
      // Predicated region
      $region29: #{residual_unit2_forward.3} parent=11 // pred_check
        %p245 = pneg %p171
      $region30: #{residual_unit2_forward.3} parent=11 // pred_check_branch
        %247 = sbr.rel (%p245) target = $region32
      $region31: #{residual_unit2_forward.3} parent=11 // pred_region
        _
      $region32: #{residual_unit2_forward.3} parent=11 // pred_fallthru
        _
      // Predicated region
      $region33: #{residual_unit2_forward.3} parent=11 // pred_check
        %p248 = pneg %p192
      $region34: #{residual_unit2_forward.3} parent=11 // pred_check_branch
        %250 = sbr.rel (%p248) target = $region36
      $region35: #{residual_unit2_forward.3} parent=11 // pred_region
        _
      $region36: #{residual_unit2_forward.3} parent=11 // pred_fallthru
        _
    $region12: #{residual_unit2_forward.3} parent=5 // pred_fallthru
      _
    %p251 = scmp.lt.s32.totalorder %s14, 2
    // Predicated region
    $region37: #{residual_unit2_forward.3} parent=5 // pred_check
      %p252 = pneg %p251
    $region38: #{residual_unit2_forward.3} parent=5 // pred_check_branch
      %254 = sbr.rel (%p252) target = $region40
    $region39: #{residual_unit2_forward.3} parent=5 // pred_region
      // Predicated region
      $region41: #{residual_unit2_forward.3} parent=39 // pred_check
        %p255 = pneg %p34
      $region42: #{residual_unit2_forward.3} parent=39 // pred_check_branch
        %257 = sbr.rel (%p255) target = $region44
      $region43: #{residual_unit2_forward.3} parent=39 // pred_region
        %p258 = scmp.lt.s32.totalorder %s14, 1
        %s259 = scalar_select %p258, %s14, 1
        %s260 = smul.addr %s259, 2
        %s261 = smul.addr %s260, 4
        %s262 = scalar_lea.vmem %s0, %s261
      $region44: #{residual_unit2_forward.3} parent=39 // pred_fallthru
        _
      // Predicated region
      $region45: #{residual_unit2_forward.3} parent=39 // pred_check
        %p263 = pneg %p60
      $region46: #{residual_unit2_forward.3} parent=39 // pred_check_branch
        %265 = sbr.rel (%p263) target = $region48
      $region47: #{residual_unit2_forward.3} parent=39 // pred_region
        %p266 = scmp.lt.s32.totalorder %s14, 1
        %s267 = scalar_select %p266, %s14, 1
        %s268 = smul.addr %s267, 2
        %s269 = smul.addr %s268, 4
        %s270 = scalar_lea.vmem %s1, %s269
      $region48: #{residual_unit2_forward.3} parent=39 // pred_fallthru
        _
    $region40: #{residual_unit2_forward.3} parent=5 // pred_fallthru
      _
    %p271 = scmp.le.s32.totalorder 1, %s14
    %p272 = scmp.lt.s32.totalorder %s14, 3
    %p273 = pnand %p271, %p272
    %p274 = pneg %p273
    // Predicated region
    $region49: #{residual_unit2_forward.3} parent=5 // pred_check
      _
    $region50: #{residual_unit2_forward.3} parent=5 // pred_check_branch
      %276 = sbr.rel (%p273) target = $region52
    $region51: #{residual_unit2_forward.3} parent=5 // pred_region
      %s277 = ssub.s32 %s14, 1
      %p278 = scmp.lt.s32.totalorder %s19, 1
      %s279 = scalar_select %p278, %s19, 1
      %s280 = smul.addr %s279, 2
      %s281 = smul.addr %s280, 4
      %s282 = scalar_lea.vmem %s0, %s281
      %p283 = pneg %p40
      %p284 = pneg %p37
      %p285 = scmp.lt.s32.totalorder %s19, 1
      %s286 = scalar_select %p285, %s19, 1
      %s287 = smul.addr %s286, 2
      %s288 = smul.addr %s287, 4
      %s289 = scalar_lea.vmem %s1, %s288
      %p290 = pneg %p66
      %p291 = pneg %p63
      %p292 = pneg %p87
      %p293 = pneg %p84
      %p294 = pneg %p108
      %p295 = pneg %p105
      %p296 = pneg %p129
      %p297 = pneg %p126
      %p298 = pneg %p150
      %p299 = pneg %p147
      %p300 = pneg %p171
      %p301 = pneg %p168
      %p302 = pneg %p192
      %p303 = pneg %p189
      %p304 = pneg %p218
      %p305 = pneg %p215
      %p306 = scmp.lt.s32.totalorder %s19, 1
      %s307 = scalar_select %p306, %s19, 1
      %s308 = smul.addr %s307, 2
      %s309 = smul.addr %s308, 8
      %s310 = scalar_lea.vmem %s8, %s309
      %p311 = scmp.lt.s32.totalorder %s19, 1
      %s312 = scalar_select %p311, %s19, 1
      %s313 = smul.addr %s312, 2
      %s314 = smul.addr %s313, 4
      %s315 = scalar_lea.vmem %s0, %s314
      %p316 = scmp.lt.s32.totalorder %s19, 1
      %s317 = scalar_select %p316, %s19, 1
      %s318 = smul.addr %s317, 2
      %s319 = smul.addr %s318, 4
      %s320 = scalar_lea.vmem %s1, %s319
      %p321 = scmp.lt.s32.totalorder %s19, 1
      %s322 = scalar_select %p321, %s19, 1
      %s323 = smul.addr %s322, 2
      %s324 = smul.addr %s323, 8
      %s325 = scalar_lea.vmem %s8, %s324
      %v327 = vld [vmem:[%s315] sm:$0xff]
      %v328 = vunpack.c.l.bf16 %v327
      %v329 = vunpack.c.h.bf16 %v327
      %v330 = vld [vmem:[%s3] sm:$0xff]
      %332 = vset.pattern.permute.xlu0 0
      %333 = vperm.xlu0 %332, %v330
      %v334 = vpop.permute.xlu0 %333
      %v336 = vmul.f32 %v328, %v334
      %v337 = vmul.f32 %v329, %v334
      %v338 = vld [vmem:[%s4] sm:$0xff]
      %340 = vset.pattern.permute.xlu0 0
      %341 = vperm.xlu0 %340, %v338
      %v342 = vpop.permute.xlu0 %341
      %v344 = vadd.f32 %v336, %v342
      %v345 = vadd.f32 %v337, %v342
      %vm346 = vcmp.ge.f32.partialorder %v344, 0.0
      %vm347 = vcmp.ge.f32.partialorder %v345, 0.0
      %v348 = vmul.f32 %v344, 0.2
      %v349 = vmul.f32 %v345, 0.2
      %v350 = vsel %vm346, %v344, %v348
      %v351 = vsel %vm347, %v345, %v349
      %vm352 = vcmask 1044344
      %353 = vst.msk [vmem:[#allocation2] sm:$0xf] %vm352, 0
      %vm354 = vcmask 134144
      %355 = vst.msk [vmem:[#allocation2 + $0xc] sm:$0xf] %vm354, 0
      %v356 = vpack.c.bf16 %v350, %v350
      %v357 = vpack.c.bf16 %v351, %v351
      %v360 = vunpack.c.l.b16 %v356
      %v361 = vunpack.c.l.b16 %v357
      %v362 = vpack.c.b16 %v361, %v360
      %364 = vst [vmem:[#allocation2 + $0x4] sm:$0xff] %v362
      %v365 = vld [vmem:[#allocation2] sm:$0xff]
      %v366 = vld [vmem:[#allocation2 + $0x8] sm:$0xff]
      %v367 = vld [vmem:[%s2] sm:$0x3]
      %v370 = vunpack.c.l.s4 1966171168
      %v371 = vunpack.c.0.s8 %v370
      %v372 = vlaneseq
      %v373 = vshrl.u32 %v372, 7
      %v374 = vsub.s32 %v371, %v373
      %v375 = vrot.slane %v367, %v374
      %v376 = vcombine.high %v375, %v375
      %v378 = vunpack.c.l.s4 1966171168
      %v379 = vunpack.c.0.s8 %v378
      %v380 = vlaneseq
      %v381 = vshrl.u32 %v380, 7
      %v382 = vsub.s32 %v379, %v381
      %v383 = vrot.slane %v375, %v382
      %v385 = vunpack.c.l.s4 1966171168
      %v386 = vunpack.c.0.s8 %v385
      %v387 = vlaneseq
      %v388 = vshrl.u32 %v387, 7
      %v389 = vsub.s32 %v386, %v388
      %v390 = vrot.slane %v376, %v389
      %v392 = vpack.i.b16 %v383, %v383
      %v394 = vlaneseq
      %v395 = vshrl.u32 %v394, 7
      %v396 = vsub.s32 0, %v395
      %v397 = vrot.slane %v392, %v396
      %v399 = vpack.i.b16 %v390, %v390
      %v401 = vlaneseq
      %v402 = vshrl.u32 %v401, 7
      %v403 = vsub.s32 0, %v402
      %v404 = vrot.slane %v399, %v403
      %v407 = vunpack.c.l.b16 %v397
      %v408 = vunpack.c.l.b16 %v404
      %v409 = vpack.c.b16 %v408, %v407
      %410 = vrot.lane.b32.xlu0 %v409, 111
      %v411 = vpop.permute.xlu0 %410
      %v412 = vrot.slane %v411, 4
      %vm413 = vcmask 908288
      %v414 = vsel %vm413, %v412, %v411
      %v417 = vmul.bf16 %v365, %v414
      %v418 = vmul.bf16 %v366, %v412
      %421 = vrot.lane.b32.xlu0 %v417, 17
      %v422 = vpop.permute.xlu0 %421
      %423 = vrot.lane.b32.xlu0 %v418, 17
      %v424 = vpop.permute.xlu0 %423
      %v425 = vrot.slane %v422, 4
      %v426 = vrot.slane %v424, 4
      %vm427 = vcmask 1043456
      %v428 = vsel %vm427, %v425, %v426
      %vm429 = vcmask 138240
      %v430 = vsel %vm429, %v422, %v428
      %432 = vst [vmem:[#allocation3] sm:$0xff] %v430
      %435 = vrot.lane.b32.xlu0 %v365, 16
      %v436 = vpop.permute.xlu0 %435
      %437 = vrot.lane.b32.xlu0 %v366, 16
      %v438 = vpop.permute.xlu0 %437
      %v439 = vrot.slane %v436, 4
      %v440 = vrot.slane %v438, 4
      %v441 = vsel %vm427, %v439, %v440
      %vm442 = vcmask 130048
      %v443 = vsel %vm442, %v436, %v441
      %445 = vst [vmem:[#allocation3 + $0x8] sm:$0xff] %v443
      %v446 = vshrl.u32 %v383, 16
      %v447 = vpack.i.b16 %v446, %v446
      %v449 = vlaneseq
      %v450 = vshrl.u32 %v449, 7
      %v451 = vsub.s32 0, %v450
      %v452 = vrot.slane %v447, %v451
      %v453 = vshrl.u32 %v390, 16
      %v454 = vpack.i.b16 %v453, %v453
      %v456 = vlaneseq
      %v457 = vshrl.u32 %v456, 7
      %v458 = vsub.s32 0, %v457
      %v459 = vrot.slane %v454, %v458
      %v462 = vunpack.c.l.b16 %v452
      %v463 = vunpack.c.l.b16 %v459
      %v464 = vpack.c.b16 %v463, %v462
      %465 = vrot.lane.b32.xlu0 %v464, 113
      %v466 = vpop.permute.xlu0 %465
      %v467 = vrot.slane %v466, 4
      %vm468 = vcmask 924672
      %v469 = vsel %vm468, %v467, %v466
      %v472 = vmul.bf16 %v365, %v469
      %v473 = vmul.bf16 %v366, %v467
      %476 = vrot.lane.b32.xlu0 %v472, 15
      %v477 = vpop.permute.xlu0 %476
      %478 = vrot.lane.b32.xlu0 %v473, 15
      %v479 = vpop.permute.xlu0 %478
      %v480 = vrot.slane %v477, 4
      %v481 = vrot.slane %v479, 4
      %v482 = vsel %vm427, %v480, %v481
      %vm483 = vcmask 121856
      %v484 = vsel %vm483, %v477, %v482
      %486 = vst [vmem:[#allocation3 + $0x10] sm:$0xff] %v484
      %487 = vrot.lane.b32.xlu0 %v409, 127
      %v488 = vpop.permute.xlu0 %487
      %v489 = vrot.slane %v488, 4
      %vm490 = vcmask 1039360
      %v491 = vsel %vm490, %v489, %v488
      %v494 = vmul.bf16 %v365, %v491
      %v495 = vmul.bf16 %v366, %v489
      %498 = vrot.lane.b32.xlu0 %v494, 1
      %v499 = vpop.permute.xlu0 %498
      %500 = vrot.lane.b32.xlu0 %v495, 1
      %v501 = vpop.permute.xlu0 %500
      %v502 = vrot.slane %v499, 4
      %v503 = vrot.slane %v501, 4
      %v504 = vsel %vm427, %v502, %v503
      %vm505 = vcmask 7168
      %v506 = vsel %vm505, %v499, %v504
      %508 = vst [vmem:[#allocation3 + $0x18] sm:$0xff] %v506
      %v509 = vrot.slane %v365, 4
      %v510 = vrot.slane %v366, 4
      %v511 = vsel %vm427, %v509, %v510
      %513 = vst [vmem:[#allocation3 + $0x20] sm:$0xff] %v511
      %514 = vrot.lane.b32.xlu0 %v365, 127
      %v515 = vpop.permute.xlu0 %514
      %516 = vrot.lane.b32.xlu0 %v366, 127
      %v517 = vpop.permute.xlu0 %516
      %v518 = vrot.slane %v515, 4
      %v519 = vrot.slane %v517, 4
      %v520 = vsel %vm427, %v518, %v519
      %v521 = vsel %vm490, %v520, %v517
      %v524 = vmul.bf16 %v521, %v464
      %525 = vst [vmem:[#allocation3 + $0x28] sm:$0xff] %v524
      %526 = vrot.lane.b32.xlu0 %v365, 113
      %v527 = vpop.permute.xlu0 %526
      %528 = vrot.lane.b32.xlu0 %v366, 113
      %v529 = vpop.permute.xlu0 %528
      %v530 = vrot.slane %v527, 4
      %v531 = vrot.slane %v529, 4
      %v532 = vsel %vm427, %v530, %v531
      %v533 = vsel %vm468, %v532, %v529
      %v536 = vmul.bf16 %v533, %v409
      %537 = vst [vmem:[#allocation3 + $0x30] sm:$0xff] %v536
      %538 = vrot.lane.b32.xlu0 %v365, 112
      %v539 = vpop.permute.xlu0 %538
      %540 = vrot.lane.b32.xlu0 %v366, 112
      %v541 = vpop.permute.xlu0 %540
      %v542 = vrot.slane %v539, 4
      %v543 = vrot.slane %v541, 4
      %v544 = vsel %vm427, %v542, %v543
      %vm545 = vcmask 916480
      %v546 = vsel %vm545, %v544, %v541
      %548 = vst [vmem:[#allocation3 + $0x38] sm:$0xff] %v546
      %549 = vrot.lane.b32.xlu0 %v365, 111
      %v550 = vpop.permute.xlu0 %549
      %551 = vrot.lane.b32.xlu0 %v366, 111
      %v552 = vpop.permute.xlu0 %551
      %v553 = vrot.slane %v550, 4
      %v554 = vrot.slane %v552, 4
      %v555 = vsel %vm427, %v553, %v554
      %v556 = vsel %vm413, %v555, %v552
      %v558 = vmul.bf16 %v556, %v464
      %559 = vst [vmem:[#allocation3 + $0x40] sm:$0xff] %v558
      %v560 = vld [vmem:[%s5] sm:$0xf]
      %v561 = vld [vmem:[#allocation3] sm:$0xff]
      %v562 = vld [vmem:[#allocation3 + $0x8] sm:$0xff]
      %v563 = vld [vmem:[#allocation3 + $0x10] sm:$0xff]
      %v564 = vld [vmem:[#allocation3 + $0x18] sm:$0xff]
      %v565 = vld [vmem:[#allocation3 + $0x20] sm:$0xff]
      %v566 = vld [vmem:[#allocation3 + $0x28] sm:$0xff]
      %v567 = vld [vmem:[#allocation3 + $0x30] sm:$0xff]
      %v568 = vld [vmem:[#allocation3 + $0x38] sm:$0xff]
      %v569 = vld [vmem:[#allocation3 + $0x40] sm:$0xff]
      %v570 = vld [vmem:[%s6] sm:$0xf]
      %v571 = vld [vmem:[%s320] sm:$0xff]
      %v573 = vcombine.high %v571, %v571
      %v575 = vpack.c.bf16 %v571, %v571
      %v576 = vpack.c.bf16 %v573, %v573
      %vm577 = vcmask 31744
      %v579 = vsel %vm577, %v570, 0
      %vm581 = vcmask 1041408
      %v583 = vsel %vm581, %v575, 0
      %v586 = vsel %vm581, %v576, 0
      %588 = vmatprep.subr.bf16.mxu0 %v586
      %589 = vmatpush1.bf16.msra.mxu0 %v583
      %590 = vmatprep.subr.bf16.mxu0 0
      %591 = vmatpush1.bf16.msra.mxu0 0
      %592 = vmatprep.subr.bf16.mxu0 0
      %593 = vmatpush1.bf16.msra.mxu0 0
      %594 = vmatprep.subr.bf16.mxu0 0
      %595 = vmatpush1.bf16.msra.mxu0 0
      %596 = vmatprep.subr.bf16.mxu0 0
      %597 = vmatpush1.bf16.msra.mxu0 0
      %598 = vmatprep.subr.bf16.mxu0 0
      %599 = vmatpush1.bf16.msra.mxu0 0
      %600 = vmatprep.subr.bf16.mxu0 0
      %601 = vmatpush1.bf16.msra.mxu0 0
      %602 = vmatprep.subr.bf16.mxu0 0
      %603 = vmatpush1.bf16.msra.mxu0 0
      %604 = vmatprep.subr.bf16.mxu0 0
      %605 = vmatpush1.bf16.msra.mxu0 0
      %606 = vmatprep.subr.bf16.mxu0 0
      %607 = vmatpush1.bf16.msra.mxu0 0
      %608 = vmatprep.subr.bf16.mxu0 0
      %609 = vmatpush1.bf16.msra.mxu0 0
      %610 = vmatprep.subr.bf16.mxu0 0
      %611 = vmatpush1.bf16.msra.mxu0 0
      %612 = vmatprep.subr.bf16.mxu0 0
      %613 = vmatpush1.bf16.msra.mxu0 0
      %614 = vmatprep.subr.bf16.mxu0 0
      %615 = vmatpush1.bf16.msra.mxu0 0
      %616 = vmatprep.subr.bf16.mxu0 0
      %617 = vmatpush1.bf16.msra.mxu0 0
      %618 = vmatprep.subr.bf16.mxu0 0
      %619 = vmatpush1.bf16.msra.mxu0 0
      %620 = vmatprep.mubr.bf16.mxu0 0
      %621 = vmatmul.mubr.bf16.gmra.mrb[0].mxu0 %v579
      %v622 = vpop.f32.mrb[0].mxu0
      %v623 = vadd.f32 0.0, %v622
      %v624 = vpop.f32.mrb[0].mxu0
      %v625 = vadd.f32 0.0, %v624
      %v626 = vpop.f32.mrb[0].mxu0
      %v627 = vpop.f32.mrb[0].mxu0
      %628 = vdwg.mxu0
      %v638 = vunpack.c.l.b16 %v561
      %v639 = vunpack.c.h.b16 %v561
      %v640 = vunpack.c.l.b16 %v562
      %v641 = vunpack.c.h.b16 %v562
      %v642 = vunpack.c.l.b16 %v563
      %v643 = vunpack.c.h.b16 %v563
      %v644 = vunpack.c.l.b16 %v564
      %v645 = vunpack.c.h.b16 %v564
      %v646 = vunpack.c.l.b16 %v565
      %v647 = vunpack.c.h.b16 %v565
      %v648 = vunpack.c.l.b16 %v566
      %v649 = vunpack.c.h.b16 %v566
      %v650 = vunpack.c.l.b16 %v567
      %v651 = vunpack.c.h.b16 %v567
      %v652 = vunpack.c.l.b16 %v568
      %v653 = vunpack.c.h.b16 %v568
      %v654 = vunpack.c.l.b16 %v569
      %v655 = vunpack.c.h.b16 %v569
      %v656 = vpack.c.b16 %v640, %v638
      %v657 = vpack.c.b16 %v641, %v639
      %v658 = vpack.c.b16 %v644, %v642
      %v659 = vpack.c.b16 %v645, %v643
      %v660 = vpack.c.b16 %v648, %v646
      %v661 = vpack.c.b16 %v649, %v647
      %v662 = vpack.c.b16 %v652, %v650
      %v663 = vpack.c.b16 %v653, %v651
      %v664 = vpack.c.b16 %v654, %v654
      %v665 = vpack.c.b16 %v655, %v655
      %vm674 = vcmask 588800
      %v676 = vsel %vm674, %v560, 0
      %vm678 = vcmask 1043456
      %v680 = vsel %vm678, %v664, 0
      %v683 = vsel %vm678, %v665, 0
      %685 = vmatprep.subr.bf16.mxu0 %v657
      %686 = vmatpush1.bf16.msra.mxu0 %v656
      %687 = vmatprep.subr.bf16.mxu0 %v659
      %688 = vmatpush1.bf16.msra.mxu0 %v658
      %689 = vmatprep.subr.bf16.mxu0 %v661
      %690 = vmatpush1.bf16.msra.mxu0 %v660
      %691 = vmatprep.subr.bf16.mxu0 %v663
      %692 = vmatpush1.bf16.msra.mxu0 %v662
      %693 = vmatprep.subr.bf16.mxu0 %v683
      %694 = vmatpush1.bf16.msra.mxu0 %v680
      %695 = vmatprep.subr.bf16.mxu0 0
      %696 = vmatpush1.bf16.msra.mxu0 0
      %697 = vmatprep.subr.bf16.mxu0 0
      %698 = vmatpush1.bf16.msra.mxu0 0
      %699 = vmatprep.subr.bf16.mxu0 0
      %700 = vmatpush1.bf16.msra.mxu0 0
      %701 = vmatprep.subr.bf16.mxu0 0
      %702 = vmatpush1.bf16.msra.mxu0 0
      %703 = vmatprep.subr.bf16.mxu0 0
      %704 = vmatpush1.bf16.msra.mxu0 0
      %705 = vmatprep.subr.bf16.mxu0 0
      %706 = vmatpush1.bf16.msra.mxu0 0
      %707 = vmatprep.subr.bf16.mxu0 0
      %708 = vmatpush1.bf16.msra.mxu0 0
      %709 = vmatprep.subr.bf16.mxu0 0
      %710 = vmatpush1.bf16.msra.mxu0 0
      %711 = vmatprep.subr.bf16.mxu0 0
      %712 = vmatpush1.bf16.msra.mxu0 0
      %713 = vmatprep.subr.bf16.mxu0 0
      %714 = vmatpush1.bf16.msra.mxu0 0
      %715 = vmatprep.subr.bf16.mxu0 0
      %716 = vmatpush1.bf16.msra.mxu0 0
      %717 = vmatprep.mubr.bf16.mxu0 0
      %718 = vmatmul.mubr.bf16.gmra.mrb[0].mxu0 %v676
      %v719 = vpop.f32.mrb[0].mxu0
      %v720 = vadd.f32 %v623, %v719
      %v721 = vpop.f32.mrb[0].mxu0
      %v722 = vadd.f32 %v625, %v721
      %v723 = vpop.f32.mrb[0].mxu0
      %v724 = vpop.f32.mrb[0].mxu0
      %725 = vdwg.mxu0
      %v726 = vld [vmem:[%s7] sm:$0xff]
      %728 = vset.pattern.permute.xlu0 0
      %729 = vperm.xlu0 %728, %v726
      %v730 = vpop.permute.xlu0 %729
      %v732 = vadd.f32 %v720, %v730
      %v733 = vadd.f32 %v722, %v730
      %734 = vst [vmem:[%s325] sm:$0xff] %v732
      %735 = vst [vmem:[%s325 + $0x8] sm:$0xff] %v733
      %p736 = scmp.lt.s32.totalorder %s19, 1
      %s737 = scalar_select %p736, %s19, 1
      %s738 = smul.addr %s737, 2
      %s739 = smul.addr %s738, 8
      %s740 = scalar_lea.vmem %s8, %s739
      // Predicated region
      $region53: #{residual_unit2_forward.3} parent=51 // pred_check
        %p741 = pneg %p215
      $region54: #{residual_unit2_forward.3} parent=51 // pred_check_branch
        %743 = sbr.rel (%p741) target = $region56
      $region55: #{residual_unit2_forward.3} parent=51 // pred_region
        _
      $region56: #{residual_unit2_forward.3} parent=51 // pred_fallthru
        _
    $region52: #{residual_unit2_forward.3} parent=5 // pred_fallthru
      _
    %p744 = scmp.le.s32.totalorder 2, %s14
    // Predicated region
    $region57: #{residual_unit2_forward.3} parent=5 // pred_check
      %p745 = pneg %p744
    $region58: #{residual_unit2_forward.3} parent=5 // pred_check_branch
      %747 = sbr.rel (%p745) target = $region60
    $region59: #{residual_unit2_forward.3} parent=5 // pred_region
      %s748 = ssub.s32 %s14, 2
      // Predicated region
      $region61: #{residual_unit2_forward.3} parent=59 // pred_check
        %p749 = pneg %p221
      $region62: #{residual_unit2_forward.3} parent=59 // pred_check_branch
        %751 = sbr.rel (%p749) target = $region64
      $region63: #{residual_unit2_forward.3} parent=59 // pred_region
        %p752 = scmp.lt.s32.totalorder %s20, 1
        %s753 = scalar_select %p752, %s20, 1
        %s754 = smul.addr %s753, 2
        %s755 = smul.addr %s754, 8
        %s756 = scalar_lea.vmem %s8, %s755
      $region64: #{residual_unit2_forward.3} parent=59 // pred_fallthru
        _
    $region60: #{residual_unit2_forward.3} parent=5 // pred_fallthru
      _
  $region6: #{residual_unit2_forward.3} parent=0 // loop_footer
    %s18 = sadd.s32 1, %s14
  $region7: #{residual_unit2_forward.3} parent=0 // loop_footer_branch
    %13 = sbr.rel target = $region3
  $region8: #{residual_unit2_forward.3} parent=0 // loop_exit
    _

</llo_original>
